<compile_context>
chip_gen: v7x
topology: tpu7x:2x2x1
jax: 0.10.0
libtpu: 0.0.40
codegen_flags: <defaults>
</compile_context>

<pallas_src>
import jax
import jax.numpy as jnp
import numpy as np
from jax.experimental import pallas as pl
from jax.experimental.pallas import tpu as pltpu

EPS = 1e-5


def _bottleneck_kernel(x_ref, w1_ref, w2_ref, w3_ref,
                       b1_ref, b2_ref, b3_ref, out_ref):
    """Fused bottleneck for one batch element.

    x_ref  : (1, H, W, Cp)    NHWC input tile, bf16, Cp = padded 4*planes
    w1_ref : (Cp, Pp)         conv1 1x1 weight (BN scale folded), bf16
    w2_ref : (9*Pp, Pp)       conv2 3x3 weight, im2col layout (kh,kw,cin)-major, bf16
    w3_ref : (Pp, Cp)         conv3 1x1 weight (BN scale folded), bf16
    b*_ref : (1, C) f32       folded BatchNorm biases
    out_ref: (1, H, W, Cp)    f32 output
    """
    _, H, W, Cp = x_ref.shape
    Pp = w1_ref.shape[1]

    # ---- conv1 (1x1) + bias + relu : bf16 MXU inputs, f32 accumulate/epilogue ----
    x = x_ref[0].reshape(H * W, Cp)                                   # bf16
    h1 = jnp.dot(x, w1_ref[...], preferred_element_type=jnp.float32)
    h1 = jnp.maximum(h1 + b1_ref[...], 0.0)                           # f32
    h1 = h1.astype(jnp.bfloat16).reshape(H, W, Pp)

    # ---- conv2 (3x3, stride=1, pad=1) via im2col -> ONE MXU matmul, K = 9*Pp ----
    Wp = ((W + 2 + 7) // 8) * 8           # sublane-aligned padded width (>= W+2)
    zrow = jnp.zeros((1, W, Pp), jnp.bfloat16)
    hp = jnp.concatenate([zrow, h1, zrow], axis=0)                    # (H+2, W, Pp)
    zl = jnp.zeros((H + 2, 1, Pp), jnp.bfloat16)
    zr = jnp.zeros((H + 2, Wp - W - 1, Pp), jnp.bfloat16)
    hp = jnp.concatenate([zl, hp, zr], axis=1)                        # (H+2, Wp, Pp)
    # Horizontal taps stacked on the lane axis, then vertical taps: channel
    # order is (kh, kw, cin), matching the (9*Pp, Pp) reshape of w2.
    hw = jnp.concatenate(
        [hp[:, 0:W, :], hp[:, 1:W + 1, :], hp[:, 2:W + 2, :]], axis=-1)   # (H+2, W, 3Pp)
    im = jnp.concatenate([hw[0:H], hw[1:H + 1], hw[2:H + 2]], axis=-1)    # (H, W, 9Pp)
    im = im.reshape(H * W, 9 * Pp)
    h2 = jnp.dot(im, w2_ref[...], preferred_element_type=jnp.float32)
    h2 = jnp.maximum(h2 + b2_ref[...], 0.0).astype(jnp.bfloat16)      # (H*W, Pp)

    # ---- conv3 (1x1) + bias + residual + relu ----
    h3 = jnp.dot(h2, w3_ref[...], preferred_element_type=jnp.float32)
    res = x_ref[0].reshape(H * W, Cp).astype(jnp.float32)   # re-read residual late
    out = jnp.maximum(h3 + b3_ref[...] + res, 0.0)
    out_ref[0] = out.reshape(H, W, Cp)


def _fold_bn(gamma, beta, mean, var):
    scale = gamma / jnp.sqrt(var + EPS)
    bias = beta - mean * scale
    return scale, bias


def _round_up(n, m):
    return (n + m - 1) // m * m


def bottleneck_forward(x_nchw, params):
    """x_nchw: (N, Cin, H, W) float32; returns (N, Cin, H, W) float32."""
    N, Cin, H, W = x_nchw.shape
    P = params["w1"].shape[0]                 # planes
    assert Cin == 4 * P, "residual add requires inplanes == planes * expansion"
    # TODO(synk): stride != 1 / downsample paths are not implemented.

    Pp = _round_up(max(P, 128), 128)          # lane-dense intermediate channels
    Cp = _round_up(max(Cin, 128), 128)        # lane-dense in/out channels

    s1, b1 = _fold_bn(params["g1"], params["be1"], params["m1"], params["v1"])
    s2, b2 = _fold_bn(params["g2"], params["be2"], params["m2"], params["v2"])
    s3, b3 = _fold_bn(params["g3"], params["be3"], params["m3"], params["v3"])

    # Fold BN scales into the conv weights; pad channel dims with zeros.
    w1_t = params["w1"][:, :, 0, 0].T * s1[None, :]                 # (Cin, P)
    w2_t = jnp.transpose(params["w2"], (2, 3, 1, 0)) * s2           # (3,3,Cin=P,Cout=P)
    w3_t = params["w3"][:, :, 0, 0].T * s3[None, :]                 # (P, Cin)

    w1_p = jnp.zeros((Cp, Pp), jnp.float32).at[:Cin, :P].set(w1_t)
    w2_p = jnp.zeros((3, 3, Pp, Pp), jnp.float32).at[:, :, :P, :P].set(w2_t)
    w2_p = w2_p.reshape(9 * Pp, Pp)                                  # (kh,kw,cin)-major
    w3_p = jnp.zeros((Pp, Cp), jnp.float32).at[:P, :Cin].set(w3_t)

    b1_p = jnp.zeros((1, Pp), jnp.float32).at[0, :P].set(b1)
    b2_p = jnp.zeros((1, Pp), jnp.float32).at[0, :P].set(b2)
    b3_p = jnp.zeros((1, Cp), jnp.float32).at[0, :Cin].set(b3)

    # bf16 MXU inputs (accumulation stays f32 inside the kernel).
    w1_b = w1_p.astype(jnp.bfloat16)
    w2_b = w2_p.astype(jnp.bfloat16)
    w3_b = w3_p.astype(jnp.bfloat16)

    x_nhwc = jnp.transpose(x_nchw, (0, 2, 3, 1)).astype(jnp.bfloat16)
    if Cp != Cin:
        x_nhwc = jnp.pad(x_nhwc, ((0, 0), (0, 0), (0, 0), (0, Cp - Cin)))

    # VMEM budget: double-buffered I/O + weights + im2col-sized intermediates.
    est = (2 * (H * W * Cp * 2 + H * W * Cp * 4)
           + (Cp * Pp + 9 * Pp * Pp + Pp * Cp) * 2
           + 2 * H * W * 9 * Pp * 2
           + 4 * H * W * Pp * 4
           + 2 * H * W * Cp * 4)
    vmem_limit = int(min(max(3 * est // 2, 32 * 1024 * 1024), 48 * 1024 * 1024))

    full = lambda shape: pl.BlockSpec(shape, lambda b: (0,) * len(shape))

    out_nhwc = pl.pallas_call(
        _bottleneck_kernel,
        out_shape=jax.ShapeDtypeStruct((N, H, W, Cp), jnp.float32),
        grid_spec=pltpu.PrefetchScalarGridSpec(
            num_scalar_prefetch=0,
            grid=(N,),
            in_specs=[
                pl.BlockSpec((1, H, W, Cp), lambda b: (b, 0, 0, 0)),
                full((Cp, Pp)),
                full((9 * Pp, Pp)),
                full((Pp, Cp)),
                full((1, Pp)), full((1, Pp)), full((1, Cp)),
            ],
            out_specs=pl.BlockSpec((1, H, W, Cp), lambda b: (b, 0, 0, 0)),
        ),
        compiler_params=pltpu.CompilerParams(
            dimension_semantics=("parallel",),
            vmem_limit_bytes=vmem_limit),
    )(x_nhwc, w1_b, w2_b, w3_b, b1_p, b2_p, b3_p)

    out = out_nhwc[..., :Cin]
    return jnp.transpose(out, (0, 3, 1, 2))


def reference_forward(x, params):
    """Pure-JAX NCHW reference (f32) using lax.conv, for correctness checking."""
    def conv(x, w, pad):
        return jax.lax.conv_general_dilated(
            x, w, window_strides=(1, 1), padding=[(pad, pad), (pad, pad)],
            dimension_numbers=("NCHW", "OIHW", "NCHW"))

    def bn(x, g, be, m, v):
        g, be, m, v = (a[None, :, None, None] for a in (g, be, m, v))
        return (x - m) / jnp.sqrt(v + EPS) * g + be

    out = jax.nn.relu(bn(conv(x, params["w1"], 0),
                         params["g1"], params["be1"], params["m1"], params["v1"]))
    out = jax.nn.relu(bn(conv(out, params["w2"], 1),
                         params["g2"], params["be2"], params["m2"], params["v2"]))
    out = bn(conv(out, params["w3"], 0),
             params["g3"], params["be3"], params["m3"], params["v3"])
    return jax.nn.relu(out + x)


def make_params(key, inplanes, planes):
    ks = jax.random.split(key, 4)
    p = {
        "w1": 0.1 * jax.random.normal(ks[0], (planes, inplanes, 1, 1), jnp.float32),
        "w2": 0.1 * jax.random.normal(ks[1], (planes, planes, 3, 3), jnp.float32),
        "w3": 0.1 * jax.random.normal(ks[2], (planes * 4, planes, 1, 1), jnp.float32),
    }
    for i, c in zip((1, 2, 3), (planes, planes, planes * 4)):
        r = jnp.arange(c, dtype=jnp.float32)
        p[f"g{i}"] = 1.0 + 0.05 * r          # gamma
        p[f"be{i}"] = 0.02 * r - 0.1          # beta
        p[f"m{i}"] = 0.01 * r                 # running mean
        p[f"v{i}"] = 1.0 + 0.1 * r            # running var
    return p


if __name__ == "__main__":
    key = jax.random.PRNGKey(0)
    k_x, k_p = jax.random.split(key)

    N, planes, H, W = 2, 4, 16, 16
    inplanes = planes * 4                     # 16, so the residual add is valid
    x = jax.random.normal(k_x, (N, inplanes, H, W), jnp.float32)
    params = make_params(k_p, inplanes, planes)

    out = jax.jit(bottleneck_forward)(x, params)
    out = jax.block_until_ready(out)

    ref = jax.block_until_ready(reference_forward(x, params))
    # Looser tolerance than the f32 version: matmul inputs (and the residual
    # read) are bf16; accumulation stays f32.
    np.testing.assert_allclose(np.asarray(out), np.asarray(ref),
                               rtol=5e-2, atol=5e-2)
    print("KERNEL_OK")
</pallas_src>

<mosaic_0001>
module attributes {stable_mosaic.version = 11 : i64} {
  func.func @_bottleneck_kernel(%arg0: i32, %arg1: memref<1x16x16x128xbf16, #tpu.memory_space<vmem>>, %arg2: memref<128x128xbf16, #tpu.memory_space<vmem>>, %arg3: memref<1152x128xbf16, #tpu.memory_space<vmem>>, %arg4: memref<128x128xbf16, #tpu.memory_space<vmem>>, %arg5: memref<1x128xf32, #tpu.memory_space<vmem>>, %arg6: memref<1x128xf32, #tpu.memory_space<vmem>>, %arg7: memref<1x128xf32, #tpu.memory_space<vmem>>, %arg8: memref<1x16x16x128xf32, #tpu.memory_space<vmem>>) attributes {dimension_semantics = [#tpu.dimension_semantics<parallel>], iteration_bounds = array<i64: 2>, scalar_prefetch = 0 : i64, scratch_operands = 0 : i64, tpu.core_type = #tpu.core_type<tc>, window_params = [{transform_indices = @transform_0, window_bounds = array<i64: 1, 16, 16, 128>}, {pipeline_mode = #tpu.pipeline_mode<synchronous>, transform_indices = @transform_1, window_bounds = array<i64: 128, 128>}, {pipeline_mode = #tpu.pipeline_mode<synchronous>, transform_indices = @transform_2, window_bounds = array<i64: 1152, 128>}, {pipeline_mode = #tpu.pipeline_mode<synchronous>, transform_indices = @transform_3, window_bounds = array<i64: 128, 128>}, {pipeline_mode = #tpu.pipeline_mode<synchronous>, transform_indices = @transform_4, window_bounds = array<i64: 1, 128>}, {pipeline_mode = #tpu.pipeline_mode<synchronous>, transform_indices = @transform_5, window_bounds = array<i64: 1, 128>}, {pipeline_mode = #tpu.pipeline_mode<synchronous>, transform_indices = @transform_6, window_bounds = array<i64: 1, 128>}, {transform_indices = @transform_7, window_bounds = array<i64: 1, 16, 16, 128>}]} {
    %c0 = arith.constant 0 : index
    %c0_0 = arith.constant 0 : index
    %c0_1 = arith.constant 0 : index
    %c0_2 = arith.constant 0 : index
    %0 = vector.load %arg1[%c0, %c0_0, %c0_1, %c0_2] : memref<1x16x16x128xbf16, #tpu.memory_space<vmem>>, vector<1x16x16x128xbf16>
    %1 = vector.shape_cast %0 : vector<1x16x16x128xbf16> to vector<16x16x128xbf16>
    %2 = vector.shape_cast %1 : vector<16x16x128xbf16> to vector<256x128xbf16>
    %c0_3 = arith.constant 0 : index
    %c0_4 = arith.constant 0 : index
    %3 = vector.load %arg2[%c0_3, %c0_4] : memref<128x128xbf16, #tpu.memory_space<vmem>>, vector<128x128xbf16>
    %cst = arith.constant dense<0.000000e+00> : vector<256x128xf32>
    %4 = tpu.matmul %2, %3, %cst {dimension_numbers = #tpu.dot_dimension_numbers<[1], [0], [0], [1], [0, 0, 1, 1], [], []>} : vector<256x128xbf16>, vector<128x128xbf16>, vector<256x128xf32> -> vector<256x128xf32>
    %c0_5 = arith.constant 0 : index
    %c0_6 = arith.constant 0 : index
    %5 = vector.load %arg5[%c0_5, %c0_6] : memref<1x128xf32, #tpu.memory_space<vmem>>, vector<1x128xf32>
    %6 = vector.broadcast %5 : vector<1x128xf32> to vector<256x128xf32>
    %7 = arith.addf %4, %6 : vector<256x128xf32>
    %cst_7 = arith.constant 0.000000e+00 : f32
    %8 = vector.broadcast %cst_7 : f32 to vector<256x128xf32>
    %9 = arith.maximumf %7, %8 : vector<256x128xf32>
    %10 = arith.truncf %9 : vector<256x128xf32> to vector<256x128xbf16>
    %11 = vector.shape_cast %10 : vector<256x128xbf16> to vector<16x16x128xbf16>
    %cst_8 = arith.constant 0.000000e+00 : bf16
    %12 = vector.broadcast %cst_8 : bf16 to vector<1x16x128xbf16>
    %13 = tpu.concatenate %12, %11, %12 in 0 : vector<1x16x128xbf16>, vector<16x16x128xbf16>, vector<1x16x128xbf16> -> vector<18x16x128xbf16>
    %cst_9 = arith.constant 0.000000e+00 : bf16
    %14 = vector.broadcast %cst_9 : bf16 to vector<18x1x128xbf16>
    %cst_10 = arith.constant 0.000000e+00 : bf16
    %15 = vector.broadcast %cst_10 : bf16 to vector<18x7x128xbf16>
    %16 = tpu.concatenate %14, %13, %15 in 1 : vector<18x1x128xbf16>, vector<18x16x128xbf16>, vector<18x7x128xbf16> -> vector<18x24x128xbf16>
    %17 = vector.extract_strided_slice %16 {offsets = [0, 0, 0], sizes = [18, 16, 128], strides = [1, 1, 1]} : vector<18x24x128xbf16> to vector<18x16x128xbf16>
    %18 = vector.extract_strided_slice %16 {offsets = [0, 1, 0], sizes = [18, 16, 128], strides = [1, 1, 1]} : vector<18x24x128xbf16> to vector<18x16x128xbf16>
    %19 = vector.extract_strided_slice %16 {offsets = [0, 2, 0], sizes = [18, 16, 128], strides = [1, 1, 1]} : vector<18x24x128xbf16> to vector<18x16x128xbf16>
    %20 = tpu.concatenate %17, %18, %19 in 2 : vector<18x16x128xbf16>, vector<18x16x128xbf16>, vector<18x16x128xbf16> -> vector<18x16x384xbf16>
    %21 = vector.extract_strided_slice %20 {offsets = [0, 0, 0], sizes = [16, 16, 384], strides = [1, 1, 1]} : vector<18x16x384xbf16> to vector<16x16x384xbf16>
    %22 = vector.extract_strided_slice %20 {offsets = [1, 0, 0], sizes = [16, 16, 384], strides = [1, 1, 1]} : vector<18x16x384xbf16> to vector<16x16x384xbf16>
    %23 = vector.extract_strided_slice %20 {offsets = [2, 0, 0], sizes = [16, 16, 384], strides = [1, 1, 1]} : vector<18x16x384xbf16> to vector<16x16x384xbf16>
    %24 = tpu.concatenate %21, %22, %23 in 2 : vector<16x16x384xbf16>, vector<16x16x384xbf16>, vector<16x16x384xbf16> -> vector<16x16x1152xbf16>
    %25 = vector.shape_cast %24 : vector<16x16x1152xbf16> to vector<256x1152xbf16>
    %c0_11 = arith.constant 0 : index
    %c0_12 = arith.constant 0 : index
    %26 = vector.load %arg3[%c0_11, %c0_12] : memref<1152x128xbf16, #tpu.memory_space<vmem>>, vector<1152x128xbf16>
    %cst_13 = arith.constant dense<0.000000e+00> : vector<256x128xf32>
    %27 = tpu.matmul %25, %26, %cst_13 {dimension_numbers = #tpu.dot_dimension_numbers<[1], [0], [0], [1], [0, 0, 1, 1], [], []>} : vector<256x1152xbf16>, vector<1152x128xbf16>, vector<256x128xf32> -> vector<256x128xf32>
    %c0_14 = arith.constant 0 : index
    %c0_15 = arith.constant 0 : index
    %28 = vector.load %arg6[%c0_14, %c0_15] : memref<1x128xf32, #tpu.memory_space<vmem>>, vector<1x128xf32>
    %29 = vector.broadcast %28 : vector<1x128xf32> to vector<256x128xf32>
    %30 = arith.addf %27, %29 : vector<256x128xf32>
    %cst_16 = arith.constant 0.000000e+00 : f32
    %31 = vector.broadcast %cst_16 : f32 to vector<256x128xf32>
    %32 = arith.maximumf %30, %31 : vector<256x128xf32>
    %33 = arith.truncf %32 : vector<256x128xf32> to vector<256x128xbf16>
    %c0_17 = arith.constant 0 : index
    %c0_18 = arith.constant 0 : index
    %34 = vector.load %arg4[%c0_17, %c0_18] : memref<128x128xbf16, #tpu.memory_space<vmem>>, vector<128x128xbf16>
    %cst_19 = arith.constant dense<0.000000e+00> : vector<256x128xf32>
    %35 = tpu.matmul %33, %34, %cst_19 {dimension_numbers = #tpu.dot_dimension_numbers<[1], [0], [0], [1], [0, 0, 1, 1], [], []>} : vector<256x128xbf16>, vector<128x128xbf16>, vector<256x128xf32> -> vector<256x128xf32>
    %c0_20 = arith.constant 0 : index
    %c0_21 = arith.constant 0 : index
    %c0_22 = arith.constant 0 : index
    %c0_23 = arith.constant 0 : index
    %36 = vector.load %arg1[%c0_20, %c0_21, %c0_22, %c0_23] : memref<1x16x16x128xbf16, #tpu.memory_space<vmem>>, vector<1x16x16x128xbf16>
    %37 = vector.shape_cast %36 : vector<1x16x16x128xbf16> to vector<16x16x128xbf16>
    %38 = vector.shape_cast %37 : vector<16x16x128xbf16> to vector<256x128xbf16>
    %39 = arith.extf %38 : vector<256x128xbf16> to vector<256x128xf32>
    %c0_24 = arith.constant 0 : index
    %c0_25 = arith.constant 0 : index
    %40 = vector.load %arg7[%c0_24, %c0_25] : memref<1x128xf32, #tpu.memory_space<vmem>>, vector<1x128xf32>
    %41 = vector.broadcast %40 : vector<1x128xf32> to vector<256x128xf32>
    %42 = arith.addf %35, %41 : vector<256x128xf32>
    %43 = arith.addf %42, %39 : vector<256x128xf32>
    %cst_26 = arith.constant 0.000000e+00 : f32
    %44 = vector.broadcast %cst_26 : f32 to vector<256x128xf32>
    %45 = arith.maximumf %43, %44 : vector<256x128xf32>
    %46 = vector.shape_cast %45 : vector<256x128xf32> to vector<16x16x128xf32>
    %c0_27 = arith.constant 0 : index
    %c0_28 = arith.constant 0 : index
    %c0_29 = arith.constant 0 : index
    %c0_30 = arith.constant 0 : index
    %47 = vector.load %arg8[%c0_27, %c0_28, %c0_29, %c0_30] : memref<1x16x16x128xf32, #tpu.memory_space<vmem>>, vector<1x16x16x128xf32>
    %48 = vector.shape_cast %47 : vector<1x16x16x128xf32> to vector<16x16x128xf32>
    %49 = vector.shape_cast %46 : vector<16x16x128xf32> to vector<1x16x16x128xf32>
    tpu.vector_store %arg8[%c0_27, %c0_28, %c0_29, %c0_30], %49 {strides = array<i32>} : memref<1x16x16x128xf32, #tpu.memory_space<vmem>>, vector<1x16x16x128xf32>,
    return
  }
  func.func @transform_0(%arg0: i32) -> (i32, i32, i32, i32) {
    %c0_i32 = arith.constant 0 : i32
    %c0_i32_0 = arith.constant 0 : i32
    %c0_i32_1 = arith.constant 0 : i32
    %c0_i32_2 = arith.constant 0 : i32
    return %arg0, %c0_i32, %c0_i32_0, %c0_i32_1 : i32, i32, i32, i32
  }
  func.func @transform_1(%arg0: i32) -> (i32, i32) {
    %c0_i32 = arith.constant 0 : i32
    %c0_i32_0 = arith.constant 0 : i32
    %c0_i32_1 = arith.constant 0 : i32
    return %c0_i32, %c0_i32_0 : i32, i32
  }
  func.func @transform_2(%arg0: i32) -> (i32, i32) {
    %c0_i32 = arith.constant 0 : i32
    %c0_i32_0 = arith.constant 0 : i32
    %c0_i32_1 = arith.constant 0 : i32
    return %c0_i32, %c0_i32_0 : i32, i32
  }
  func.func @transform_3(%arg0: i32) -> (i32, i32) {
    %c0_i32 = arith.constant 0 : i32
    %c0_i32_0 = arith.constant 0 : i32
    %c0_i32_1 = arith.constant 0 : i32
    return %c0_i32, %c0_i32_0 : i32, i32
  }
  func.func @transform_4(%arg0: i32) -> (i32, i32) {
    %c0_i32 = arith.constant 0 : i32
    %c0_i32_0 = arith.constant 0 : i32
    %c0_i32_1 = arith.constant 0 : i32
    return %c0_i32, %c0_i32_0 : i32, i32
  }
  func.func @transform_5(%arg0: i32) -> (i32, i32) {
    %c0_i32 = arith.constant 0 : i32
    %c0_i32_0 = arith.constant 0 : i32
    %c0_i32_1 = arith.constant 0 : i32
    return %c0_i32, %c0_i32_0 : i32, i32
  }
  func.func @transform_6(%arg0: i32) -> (i32, i32) {
    %c0_i32 = arith.constant 0 : i32
    %c0_i32_0 = arith.constant 0 : i32
    %c0_i32_1 = arith.constant 0 : i32
    return %c0_i32, %c0_i32_0 : i32, i32
  }
  func.func @transform_7(%arg0: i32) -> (i32, i32, i32, i32) {
    %c0_i32 = arith.constant 0 : i32
    %c0_i32_0 = arith.constant 0 : i32
    %c0_i32_1 = arith.constant 0 : i32
    %c0_i32_2 = arith.constant 0 : i32
    return %arg0, %c0_i32, %c0_i32_0, %c0_i32_1 : i32, i32, i32, i32
  }
}

</mosaic_0001>

<llo_original>
// kernel: bottleneck_forward.1
$region0: #{bottleneck_forward.1}
  #allocation0 [shape = 'u32[]', space=smem, size = 0x4, offset = 0x4, fixed_abs, tag = 'smem constant byte address 0x4 - core index']
  #allocation1 [shape = 'u32[144,128]{1,0:T(1,128)}', space=vmem, size = 0x12000, scoped, tag = 'internal scratch']
  %s0 = inlined_call_operand.vmem [shape: bf16[2,16,16,128], index: 0, kind: input, shape index: {}]
  %s1 = inlined_call_operand.vmem [shape: bf16[128,128], index: 1, kind: input, shape index: {}]
  %s2 = inlined_call_operand.vmem [shape: bf16[1152,128], index: 2, kind: input, shape index: {}]
  %s3 = inlined_call_operand.vmem [shape: bf16[128,128], index: 3, kind: input, shape index: {}]
  %s4 = inlined_call_operand.vmem [shape: f32[1,128], index: 4, kind: input, shape index: {}]
  %s5 = inlined_call_operand.vmem [shape: f32[1,128], index: 5, kind: input, shape index: {}]
  %s6 = inlined_call_operand.vmem [shape: f32[1,128], index: 6, kind: input, shape index: {}]
  %s7 = inlined_call_operand.vmem [shape: f32[2,16,16,128], index: 7, kind: output, shape index: {}]
  %s8 = sld [smem:[#allocation0]]
  $region61: #{bottleneck_forward.1} parent=0
    _
  %s10 = ssub.s32 1, %s8
  %s11 = scalar_select 0, %s10, %s8
  loop: start=0, step=1, limit=4
  $region2: #{bottleneck_forward.1} parent=0 // loop_pre_header
    _
  $region3: #{bottleneck_forward.1} parent=0 // loop_header
    %s13 = sphi 0, %s17
    %p14 = scmp.ge.s32.totalorder %s13, 4
    %s23 = sphi 0, %s25
    %s26 = sphi 0, %s23
    %s27 = sphi 0, %s26
    %s43 = sphi 0, %s27
    %s47 = sphi 0, %s47
    %s49 = sphi 0, %s47
    %s50 = sphi 0, %s49
    %s64 = sphi 0, %s50
    %s68 = sphi 0, %s68
    %s70 = sphi 0, %s68
    %s71 = sphi 0, %s70
    %s85 = sphi 0, %s71
    %s89 = sphi 0, %s89
    %s91 = sphi 0, %s89
    %s92 = sphi 0, %s91
    %s106 = sphi 0, %s92
    %s110 = sphi 0, %s110
    %s112 = sphi 0, %s110
    %s113 = sphi 0, %s112
    %s127 = sphi 0, %s113
    %s131 = sphi 0, %s131
    %s133 = sphi 0, %s131
    %s134 = sphi 0, %s133
    %s148 = sphi 0, %s134
    %s152 = sphi 0, %s152
    %s154 = sphi 0, %s152
    %s155 = sphi 0, %s154
    %s169 = sphi 0, %s155
    %s175 = sphi 0, %s177
    %s178 = sphi 0, %s175
    %s179 = sphi 0, %s178
    %s195 = sphi 0, %s179
  $region4: #{bottleneck_forward.1} parent=0 // loop_header_branch
    %16 = sbr.rel (%p14) target = $region8
  $region5: #{bottleneck_forward.1} parent=0 // loop_body
    %s18 = ssub.s32 %s13, 1
    %s19 = ssub.s32 %s13, 2
    %s20 = sadd.s32 %s13, 1
    %s21 = ssub.s32 %s13, %s20
    %p22 = scmp.eq.s32.totalorder %s21, 0
    %s24 = sadd.s32 %s23, 1
    %s25 = scalar_select %p22, %s23, %s24
    %p28 = pneg %p22
    %p29 = scmp.eq.s32.totalorder %s13, 1
    %p30 = por %p28, %p29
    %p31 = scmp.ne.s32.totalorder %s23, %s26
    %p32 = scmp.eq.s32.totalorder %s13, 0
    %p33 = por %p31, %p32
    %p34 = scmp.ne.s32.totalorder %s23, %s26
    %p35 = scmp.eq.s32.totalorder %s18, 1
    %p36 = por %p34, %p35
    %p37 = scmp.ne.s32.totalorder %s26, %s27
    %p38 = scmp.eq.s32.totalorder %s18, 0
    %p39 = por %p37, %p38
    %p40 = scmp.ne.s32.totalorder %s26, %s27
    %p41 = scmp.eq.s32.totalorder %s19, 1
    %p42 = por %p40, %p41
    %p44 = scmp.ne.s32.totalorder %s27, %s43
    %p45 = scmp.eq.s32.totalorder %s19, 0
    %p46 = por %p44, %p45
    %s48 = sadd.s32 %s47, 1
    %p51 = scmp.eq.s32.totalorder %s13, 1
    %p52 = scmp.ne.s32.totalorder %s47, %s49
    %p53 = scmp.eq.s32.totalorder %s13, 0
    %p54 = por %p52, %p53
    %p55 = scmp.ne.s32.totalorder %s47, %s49
    %p56 = scmp.eq.s32.totalorder %s18, 1
    %p57 = por %p55, %p56
    %p58 = scmp.ne.s32.totalorder %s49, %s50
    %p59 = scmp.eq.s32.totalorder %s18, 0
    %p60 = por %p58, %p59
    %p61 = scmp.ne.s32.totalorder %s49, %s50
    %p62 = scmp.eq.s32.totalorder %s19, 1
    %p63 = por %p61, %p62
    %p65 = scmp.ne.s32.totalorder %s50, %s64
    %p66 = scmp.eq.s32.totalorder %s19, 0
    %p67 = por %p65, %p66
    %s69 = sadd.s32 %s68, 1
    %p72 = scmp.eq.s32.totalorder %s13, 1
    %p73 = scmp.ne.s32.totalorder %s68, %s70
    %p74 = scmp.eq.s32.totalorder %s13, 0
    %p75 = por %p73, %p74
    %p76 = scmp.ne.s32.totalorder %s68, %s70
    %p77 = scmp.eq.s32.totalorder %s18, 1
    %p78 = por %p76, %p77
    %p79 = scmp.ne.s32.totalorder %s70, %s71
    %p80 = scmp.eq.s32.totalorder %s18, 0
    %p81 = por %p79, %p80
    %p82 = scmp.ne.s32.totalorder %s70, %s71
    %p83 = scmp.eq.s32.totalorder %s19, 1
    %p84 = por %p82, %p83
    %p86 = scmp.ne.s32.totalorder %s71, %s85
    %p87 = scmp.eq.s32.totalorder %s19, 0
    %p88 = por %p86, %p87
    %s90 = sadd.s32 %s89, 1
    %p93 = scmp.eq.s32.totalorder %s13, 1
    %p94 = scmp.ne.s32.totalorder %s89, %s91
    %p95 = scmp.eq.s32.totalorder %s13, 0
    %p96 = por %p94, %p95
    %p97 = scmp.ne.s32.totalorder %s89, %s91
    %p98 = scmp.eq.s32.totalorder %s18, 1
    %p99 = por %p97, %p98
    %p100 = scmp.ne.s32.totalorder %s91, %s92
    %p101 = scmp.eq.s32.totalorder %s18, 0
    %p102 = por %p100, %p101
    %p103 = scmp.ne.s32.totalorder %s91, %s92
    %p104 = scmp.eq.s32.totalorder %s19, 1
    %p105 = por %p103, %p104
    %p107 = scmp.ne.s32.totalorder %s92, %s106
    %p108 = scmp.eq.s32.totalorder %s19, 0
    %p109 = por %p107, %p108
    %s111 = sadd.s32 %s110, 1
    %p114 = scmp.eq.s32.totalorder %s13, 1
    %p115 = scmp.ne.s32.totalorder %s110, %s112
    %p116 = scmp.eq.s32.totalorder %s13, 0
    %p117 = por %p115, %p116
    %p118 = scmp.ne.s32.totalorder %s110, %s112
    %p119 = scmp.eq.s32.totalorder %s18, 1
    %p120 = por %p118, %p119
    %p121 = scmp.ne.s32.totalorder %s112, %s113
    %p122 = scmp.eq.s32.totalorder %s18, 0
    %p123 = por %p121, %p122
    %p124 = scmp.ne.s32.totalorder %s112, %s113
    %p125 = scmp.eq.s32.totalorder %s19, 1
    %p126 = por %p124, %p125
    %p128 = scmp.ne.s32.totalorder %s113, %s127
    %p129 = scmp.eq.s32.totalorder %s19, 0
    %p130 = por %p128, %p129
    %s132 = sadd.s32 %s131, 1
    %p135 = scmp.eq.s32.totalorder %s13, 1
    %p136 = scmp.ne.s32.totalorder %s131, %s133
    %p137 = scmp.eq.s32.totalorder %s13, 0
    %p138 = por %p136, %p137
    %p139 = scmp.ne.s32.totalorder %s131, %s133
    %p140 = scmp.eq.s32.totalorder %s18, 1
    %p141 = por %p139, %p140
    %p142 = scmp.ne.s32.totalorder %s133, %s134
    %p143 = scmp.eq.s32.totalorder %s18, 0
    %p144 = por %p142, %p143
    %p145 = scmp.ne.s32.totalorder %s133, %s134
    %p146 = scmp.eq.s32.totalorder %s19, 1
    %p147 = por %p145, %p146
    %p149 = scmp.ne.s32.totalorder %s134, %s148
    %p150 = scmp.eq.s32.totalorder %s19, 0
    %p151 = por %p149, %p150
    %s153 = sadd.s32 %s152, 1
    %p156 = scmp.eq.s32.totalorder %s13, 1
    %p157 = scmp.ne.s32.totalorder %s152, %s154
    %p158 = scmp.eq.s32.totalorder %s13, 0
    %p159 = por %p157, %p158
    %p160 = scmp.ne.s32.totalorder %s152, %s154
    %p161 = scmp.eq.s32.totalorder %s18, 1
    %p162 = por %p160, %p161
    %p163 = scmp.ne.s32.totalorder %s154, %s155
    %p164 = scmp.eq.s32.totalorder %s18, 0
    %p165 = por %p163, %p164
    %p166 = scmp.ne.s32.totalorder %s154, %s155
    %p167 = scmp.eq.s32.totalorder %s19, 1
    %p168 = por %p166, %p167
    %p170 = scmp.ne.s32.totalorder %s155, %s169
    %p171 = scmp.eq.s32.totalorder %s19, 0
    %p172 = por %p170, %p171
    %s173 = ssub.s32 %s13, %s20
    %p174 = scmp.eq.s32.totalorder %s173, 0
    %s176 = sadd.s32 %s175, 1
    %s177 = scalar_select %p174, %s175, %s176
    %p180 = pneg %p174
    %p181 = scmp.eq.s32.totalorder %s13, 1
    %p182 = por %p180, %p181
    %p183 = scmp.ne.s32.totalorder %s175, %s178
    %p184 = scmp.eq.s32.totalorder %s13, 0
    %p185 = por %p183, %p184
    %p186 = scmp.ne.s32.totalorder %s175, %s178
    %p187 = scmp.eq.s32.totalorder %s18, 1
    %p188 = por %p186, %p187
    %p189 = scmp.ne.s32.totalorder %s178, %s179
    %p190 = scmp.eq.s32.totalorder %s18, 0
    %p191 = por %p189, %p190
    %p192 = scmp.ne.s32.totalorder %s178, %s179
    %p193 = scmp.eq.s32.totalorder %s19, 1
    %p194 = por %p192, %p193
    %p196 = scmp.ne.s32.totalorder %s179, %s195
    %p197 = scmp.eq.s32.totalorder %s19, 0
    %p198 = por %p196, %p197
    %p199 = scmp.le.s32.totalorder 1, %s13
    %p200 = scmp.lt.s32.totalorder %s13, 3
    %p201 = pnand %p199, %p200
    %p202 = pneg %p201
    // Predicated region
    $region9: #{bottleneck_forward.1} parent=5 // pred_check
      _
    $region10: #{bottleneck_forward.1} parent=5 // pred_check_branch
      %204 = sbr.rel (%p201) target = $region12
    $region11: #{bottleneck_forward.1} parent=5 // pred_region
      %s205 = ssub.s32 %s13, 1
      // Predicated region
      $region13: #{bottleneck_forward.1} parent=11 // pred_check
        %p206 = pneg %p60
      $region14: #{bottleneck_forward.1} parent=11 // pred_check_branch
        %208 = sbr.rel (%p206) target = $region16
      $region15: #{bottleneck_forward.1} parent=11 // pred_region
        _
      $region16: #{bottleneck_forward.1} parent=11 // pred_fallthru
        _
      // Predicated region
      $region17: #{bottleneck_forward.1} parent=11 // pred_check
        %p209 = pneg %p81
      $region18: #{bottleneck_forward.1} parent=11 // pred_check_branch
        %211 = sbr.rel (%p209) target = $region20
      $region19: #{bottleneck_forward.1} parent=11 // pred_region
        _
      $region20: #{bottleneck_forward.1} parent=11 // pred_fallthru
        _
      // Predicated region
      $region21: #{bottleneck_forward.1} parent=11 // pred_check
        %p212 = pneg %p102
      $region22: #{bottleneck_forward.1} parent=11 // pred_check_branch
        %214 = sbr.rel (%p212) target = $region24
      $region23: #{bottleneck_forward.1} parent=11 // pred_region
        _
      $region24: #{bottleneck_forward.1} parent=11 // pred_fallthru
        _
      // Predicated region
      $region25: #{bottleneck_forward.1} parent=11 // pred_check
        %p215 = pneg %p123
      $region26: #{bottleneck_forward.1} parent=11 // pred_check_branch
        %217 = sbr.rel (%p215) target = $region28
      $region27: #{bottleneck_forward.1} parent=11 // pred_region
        _
      $region28: #{bottleneck_forward.1} parent=11 // pred_fallthru
        _
      // Predicated region
      $region29: #{bottleneck_forward.1} parent=11 // pred_check
        %p218 = pneg %p144
      $region30: #{bottleneck_forward.1} parent=11 // pred_check_branch
        %220 = sbr.rel (%p218) target = $region32
      $region31: #{bottleneck_forward.1} parent=11 // pred_region
        _
      $region32: #{bottleneck_forward.1} parent=11 // pred_fallthru
        _
      // Predicated region
      $region33: #{bottleneck_forward.1} parent=11 // pred_check
        %p221 = pneg %p165
      $region34: #{bottleneck_forward.1} parent=11 // pred_check_branch
        %223 = sbr.rel (%p221) target = $region36
      $region35: #{bottleneck_forward.1} parent=11 // pred_region
        _
      $region36: #{bottleneck_forward.1} parent=11 // pred_fallthru
        _
    $region12: #{bottleneck_forward.1} parent=5 // pred_fallthru
      _
    %p224 = scmp.lt.s32.totalorder %s13, 2
    // Predicated region
    $region37: #{bottleneck_forward.1} parent=5 // pred_check
      %p225 = pneg %p224
    $region38: #{bottleneck_forward.1} parent=5 // pred_check_branch
      %227 = sbr.rel (%p225) target = $region40
    $region39: #{bottleneck_forward.1} parent=5 // pred_region
      // Predicated region
      $region41: #{bottleneck_forward.1} parent=39 // pred_check
        %p228 = pneg %p33
      $region42: #{bottleneck_forward.1} parent=39 // pred_check_branch
        %230 = sbr.rel (%p228) target = $region44
      $region43: #{bottleneck_forward.1} parent=39 // pred_region
        %p231 = scmp.lt.s32.totalorder %s13, 1
        %s232 = scalar_select %p231, %s13, 1
        %s233 = smul.addr %s232, 32
        %s234 = smul.addr %s233, 4
        %s235 = scalar_lea.vmem %s0, %s234
      $region44: #{bottleneck_forward.1} parent=39 // pred_fallthru
        _
    $region40: #{bottleneck_forward.1} parent=5 // pred_fallthru
      _
    %p236 = scmp.le.s32.totalorder 1, %s13
    %p237 = scmp.lt.s32.totalorder %s13, 3
    %p238 = pnand %p236, %p237
    %p239 = pneg %p238
    // Predicated region
    $region45: #{bottleneck_forward.1} parent=5 // pred_check
      _
    $region46: #{bottleneck_forward.1} parent=5 // pred_check_branch
      %241 = sbr.rel (%p238) target = $region48
    $region47: #{bottleneck_forward.1} parent=5 // pred_region
      %s242 = ssub.s32 %s13, 1
      %p243 = scmp.lt.s32.totalorder %s18, 1
      %s244 = scalar_select %p243, %s18, 1
      %s245 = smul.addr %s244, 32
      %s246 = smul.addr %s245, 4
      %s247 = scalar_lea.vmem %s0, %s246
      %p248 = pneg %p39
      %p249 = pneg %p36
      %p250 = pneg %p60
      %p251 = pneg %p57
      %p252 = pneg %p81
      %p253 = pneg %p78
      %p254 = pneg %p102
      %p255 = pneg %p99
      %p256 = pneg %p123
      %p257 = pneg %p120
      %p258 = pneg %p144
      %p259 = pneg %p141
      %p260 = pneg %p165
      %p261 = pneg %p162
      %p262 = pneg %p191
      %p263 = pneg %p188
      %p264 = scmp.lt.s32.totalorder %s18, 1
      %s265 = scalar_select %p264, %s18, 1
      %s266 = smul.addr %s265, 32
      %s267 = smul.addr %s266, 8
      %s268 = scalar_lea.vmem %s7, %s267
      %p269 = scmp.lt.s32.totalorder %s18, 1
      %s270 = scalar_select %p269, %s18, 1
      %s271 = smul.addr %s270, 32
      %s272 = smul.addr %s271, 4
      %s273 = scalar_lea.vmem %s0, %s272
      %p274 = scmp.lt.s32.totalorder %s18, 1
      %s275 = scalar_select %p274, %s18, 1
      %s276 = smul.addr %s275, 32
      %s277 = smul.addr %s276, 8
      %s278 = scalar_lea.vmem %s7, %s277
      %v280 = vld [vmem:[%s273] sm:$0xf]
      %v281 = vld [vmem:[%s273 + $0x4] sm:$0xf]
      %v282 = vld [vmem:[%s273 + $0x8] sm:$0xf]
      %v283 = vld [vmem:[%s273 + $0xc] sm:$0xf]
      %v284 = vld [vmem:[%s273 + $0x10] sm:$0xf]
      %v285 = vld [vmem:[%s273 + $0x14] sm:$0xf]
      %v286 = vld [vmem:[%s273 + $0x18] sm:$0xf]
      %v287 = vld [vmem:[%s273 + $0x1c] sm:$0xf]
      %v288 = vld [vmem:[%s273 + $0x20] sm:$0xf]
      %v289 = vld [vmem:[%s273 + $0x24] sm:$0xf]
      %v290 = vld [vmem:[%s273 + $0x28] sm:$0xf]
      %v291 = vld [vmem:[%s273 + $0x2c] sm:$0xf]
      %v292 = vld [vmem:[%s273 + $0x30] sm:$0xf]
      %v293 = vld [vmem:[%s273 + $0x34] sm:$0xf]
      %v294 = vld [vmem:[%s273 + $0x38] sm:$0xf]
      %v295 = vld [vmem:[%s273 + $0x3c] sm:$0xf]
      %v296 = vld [vmem:[%s273 + $0x40] sm:$0xf]
      %v297 = vld [vmem:[%s273 + $0x44] sm:$0xf]
      %v298 = vld [vmem:[%s273 + $0x48] sm:$0xf]
      %v299 = vld [vmem:[%s273 + $0x4c] sm:$0xf]
      %v300 = vld [vmem:[%s273 + $0x50] sm:$0xf]
      %v301 = vld [vmem:[%s273 + $0x54] sm:$0xf]
      %v302 = vld [vmem:[%s273 + $0x58] sm:$0xf]
      %v303 = vld [vmem:[%s273 + $0x5c] sm:$0xf]
      %v304 = vld [vmem:[%s273 + $0x60] sm:$0xf]
      %v305 = vld [vmem:[%s273 + $0x64] sm:$0xf]
      %v306 = vld [vmem:[%s273 + $0x68] sm:$0xf]
      %v307 = vld [vmem:[%s273 + $0x6c] sm:$0xf]
      %v308 = vld [vmem:[%s273 + $0x70] sm:$0xf]
      %v309 = vld [vmem:[%s273 + $0x74] sm:$0xf]
      %v310 = vld [vmem:[%s273 + $0x78] sm:$0xf]
      %v311 = vld [vmem:[%s273 + $0x7c] sm:$0xf]
      %v312 = vld [vmem:[%s1] sm:$0xf]
      %v313 = vld [vmem:[%s1 + $0x4] sm:$0xf]
      %v314 = vld [vmem:[%s1 + $0x8] sm:$0xf]
      %v315 = vld [vmem:[%s1 + $0xc] sm:$0xf]
      %v316 = vld [vmem:[%s1 + $0x10] sm:$0xf]
      %v317 = vld [vmem:[%s1 + $0x14] sm:$0xf]
      %v318 = vld [vmem:[%s1 + $0x18] sm:$0xf]
      %v319 = vld [vmem:[%s1 + $0x1c] sm:$0xf]
      %v320 = vld [vmem:[%s1 + $0x20] sm:$0xf]
      %v321 = vld [vmem:[%s1 + $0x24] sm:$0xf]
      %v322 = vld [vmem:[%s1 + $0x28] sm:$0xf]
      %v323 = vld [vmem:[%s1 + $0x2c] sm:$0xf]
      %v324 = vld [vmem:[%s1 + $0x30] sm:$0xf]
      %v325 = vld [vmem:[%s1 + $0x34] sm:$0xf]
      %v326 = vld [vmem:[%s1 + $0x38] sm:$0xf]
      %v327 = vld [vmem:[%s1 + $0x3c] sm:$0xf]
      %v328 = vld [vmem:[%s4] sm:$0x1]
      %v330 = vlaneseq
      %v331 = vshrl.u32 %v330, 7
      %v332 = vsub.s32 0, %v331
      %v333 = vrot.slane %v328, %v332
      %v367 = vunpack.c.l.b16 %v280
      %v368 = vunpack.c.l.b16 %v281
      %v369 = vunpack.c.l.b16 %v282
      %v370 = vunpack.c.l.b16 %v283
      %v371 = vunpack.c.l.b16 %v284
      %v372 = vunpack.c.l.b16 %v285
      %v373 = vunpack.c.l.b16 %v286
      %v374 = vunpack.c.l.b16 %v287
      %v375 = vunpack.c.l.b16 %v288
      %v376 = vunpack.c.l.b16 %v289
      %v377 = vunpack.c.l.b16 %v290
      %v378 = vunpack.c.l.b16 %v291
      %v379 = vunpack.c.l.b16 %v292
      %v380 = vunpack.c.l.b16 %v293
      %v381 = vunpack.c.l.b16 %v294
      %v382 = vunpack.c.l.b16 %v295
      %v383 = vunpack.c.l.b16 %v296
      %v384 = vunpack.c.l.b16 %v297
      %v385 = vunpack.c.l.b16 %v298
      %v386 = vunpack.c.l.b16 %v299
      %v387 = vunpack.c.l.b16 %v300
      %v388 = vunpack.c.l.b16 %v301
      %v389 = vunpack.c.l.b16 %v302
      %v390 = vunpack.c.l.b16 %v303
      %v391 = vunpack.c.l.b16 %v304
      %v392 = vunpack.c.l.b16 %v305
      %v393 = vunpack.c.l.b16 %v306
      %v394 = vunpack.c.l.b16 %v307
      %v395 = vunpack.c.l.b16 %v308
      %v396 = vunpack.c.l.b16 %v309
      %v397 = vunpack.c.l.b16 %v310
      %v398 = vunpack.c.l.b16 %v311
      %v399 = vpack.c.b16 %v368, %v367
      %v400 = vpack.c.b16 %v370, %v369
      %v401 = vpack.c.b16 %v372, %v371
      %v402 = vpack.c.b16 %v374, %v373
      %v403 = vpack.c.b16 %v376, %v375
      %v404 = vpack.c.b16 %v378, %v377
      %v405 = vpack.c.b16 %v380, %v379
      %v406 = vpack.c.b16 %v382, %v381
      %v407 = vpack.c.b16 %v384, %v383
      %v408 = vpack.c.b16 %v386, %v385
      %v409 = vpack.c.b16 %v388, %v387
      %v410 = vpack.c.b16 %v390, %v389
      %v411 = vpack.c.b16 %v392, %v391
      %v412 = vpack.c.b16 %v394, %v393
      %v413 = vpack.c.b16 %v396, %v395
      %v414 = vpack.c.b16 %v398, %v397
      %v447 = vunpack.c.l.b16 %v312
      %v448 = vunpack.c.l.b16 %v313
      %v449 = vunpack.c.l.b16 %v314
      %v450 = vunpack.c.l.b16 %v315
      %v451 = vunpack.c.l.b16 %v316
      %v452 = vunpack.c.l.b16 %v317
      %v453 = vunpack.c.l.b16 %v318
      %v454 = vunpack.c.l.b16 %v319
      %v455 = vunpack.c.l.b16 %v320
      %v456 = vunpack.c.l.b16 %v321
      %v457 = vunpack.c.l.b16 %v322
      %v458 = vunpack.c.l.b16 %v323
      %v459 = vunpack.c.l.b16 %v324
      %v460 = vunpack.c.l.b16 %v325
      %v461 = vunpack.c.l.b16 %v326
      %v462 = vunpack.c.l.b16 %v327
      %v463 = vpack.c.b16 %v448, %v447
      %v464 = vpack.c.b16 %v450, %v449
      %v465 = vpack.c.b16 %v452, %v451
      %v466 = vpack.c.b16 %v454, %v453
      %v467 = vpack.c.b16 %v456, %v455
      %v468 = vpack.c.b16 %v458, %v457
      %v469 = vpack.c.b16 %v460, %v459
      %v470 = vpack.c.b16 %v462, %v461
      %479 = vmatprep.subr.bf16.mxu0 0
      %480 = vmatpush1.bf16.msra.mxu0 %v463
      %481 = vmatprep.subr.bf16.mxu0 0
      %482 = vmatpush1.bf16.msra.mxu0 %v464
      %483 = vmatprep.subr.bf16.mxu0 0
      %484 = vmatpush1.bf16.msra.mxu0 %v465
      %485 = vmatprep.subr.bf16.mxu0 0
      %486 = vmatpush1.bf16.msra.mxu0 %v466
      %487 = vmatprep.subr.bf16.mxu0 0
      %488 = vmatpush1.bf16.msra.mxu0 %v467
      %489 = vmatprep.subr.bf16.mxu0 0
      %490 = vmatpush1.bf16.msra.mxu0 %v468
      %491 = vmatprep.subr.bf16.mxu0 0
      %492 = vmatpush1.bf16.msra.mxu0 %v469
      %493 = vmatprep.subr.bf16.mxu0 0
      %494 = vmatpush1.bf16.msra.mxu0 %v470
      %495 = vmatprep.subr.bf16.mxu0 0
      %496 = vmatpush1.bf16.msra.mxu0 0
      %497 = vmatprep.subr.bf16.mxu0 0
      %498 = vmatpush1.bf16.msra.mxu0 0
      %499 = vmatprep.subr.bf16.mxu0 0
      %500 = vmatpush1.bf16.msra.mxu0 0
      %501 = vmatprep.subr.bf16.mxu0 0
      %502 = vmatpush1.bf16.msra.mxu0 0
      %503 = vmatprep.subr.bf16.mxu0 0
      %504 = vmatpush1.bf16.msra.mxu0 0
      %505 = vmatprep.subr.bf16.mxu0 0
      %506 = vmatpush1.bf16.msra.mxu0 0
      %507 = vmatprep.subr.bf16.mxu0 0
      %508 = vmatpush1.bf16.msra.mxu0 0
      %509 = vmatprep.subr.bf16.mxu0 0
      %510 = vmatpush1.bf16.msra.mxu0 0
      %511 = vmatprep.mubr.bf16.mxu0 0
      %512 = vmatmul.mubr.bf16.gmra.mrb[0].mxu0 %v399
      %v513 = vpop.f32.mrb[0].mxu0
      %v514 = vadd.f32 %v333, %v513
      %v515 = vpop.f32.mrb[0].mxu0
      %v516 = vpop.f32.mrb[0].mxu0
      %v517 = vadd.f32 %v333, %v516
      %v518 = vpop.f32.mrb[0].mxu0
      %519 = vmatprep.mubr.bf16.mxu0 0
      %520 = vmatmul.mubr.bf16.gmra.mrb[0].mxu0 %v400
      %v521 = vpop.f32.mrb[0].mxu0
      %v522 = vadd.f32 %v333, %v521
      %v523 = vpop.f32.mrb[0].mxu0
      %v524 = vpop.f32.mrb[0].mxu0
      %v525 = vadd.f32 %v333, %v524
      %v526 = vpop.f32.mrb[0].mxu0
      %527 = vmatprep.mubr.bf16.mxu0 0
      %528 = vmatmul.mubr.bf16.gmra.mrb[0].mxu0 %v401
      %v529 = vpop.f32.mrb[0].mxu0
      %v530 = vadd.f32 %v333, %v529
      %v531 = vpop.f32.mrb[0].mxu0
      %v532 = vpop.f32.mrb[0].mxu0
      %v533 = vadd.f32 %v333, %v532
      %v534 = vpop.f32.mrb[0].mxu0
      %535 = vmatprep.mubr.bf16.mxu0 0
      %536 = vmatmul.mubr.bf16.gmra.mrb[0].mxu0 %v402
      %v537 = vpop.f32.mrb[0].mxu0
      %v538 = vadd.f32 %v333, %v537
      %v539 = vpop.f32.mrb[0].mxu0
      %v540 = vpop.f32.mrb[0].mxu0
      %v541 = vadd.f32 %v333, %v540
      %v542 = vpop.f32.mrb[0].mxu0
      %543 = vmatprep.mubr.bf16.mxu0 0
      %544 = vmatmul.mubr.bf16.gmra.mrb[0].mxu0 %v403
      %v545 = vpop.f32.mrb[0].mxu0
      %v546 = vadd.f32 %v333, %v545
      %v547 = vpop.f32.mrb[0].mxu0
      %v548 = vpop.f32.mrb[0].mxu0
      %v549 = vadd.f32 %v333, %v548
      %v550 = vpop.f32.mrb[0].mxu0
      %551 = vmatprep.mubr.bf16.mxu0 0
      %552 = vmatmul.mubr.bf16.gmra.mrb[0].mxu0 %v404
      %v553 = vpop.f32.mrb[0].mxu0
      %v554 = vadd.f32 %v333, %v553
      %v555 = vpop.f32.mrb[0].mxu0
      %v556 = vpop.f32.mrb[0].mxu0
      %v557 = vadd.f32 %v333, %v556
      %v558 = vpop.f32.mrb[0].mxu0
      %559 = vmatprep.mubr.bf16.mxu0 0
      %560 = vmatmul.mubr.bf16.gmra.mrb[0].mxu0 %v405
      %v561 = vpop.f32.mrb[0].mxu0
      %v562 = vadd.f32 %v333, %v561
      %v563 = vpop.f32.mrb[0].mxu0
      %v564 = vpop.f32.mrb[0].mxu0
      %v565 = vadd.f32 %v333, %v564
      %v566 = vpop.f32.mrb[0].mxu0
      %567 = vmatprep.mubr.bf16.mxu0 0
      %568 = vmatmul.mubr.bf16.gmra.mrb[0].mxu0 %v406
      %v569 = vpop.f32.mrb[0].mxu0
      %v570 = vadd.f32 %v333, %v569
      %v571 = vpop.f32.mrb[0].mxu0
      %v572 = vpop.f32.mrb[0].mxu0
      %v573 = vadd.f32 %v333, %v572
      %v574 = vpop.f32.mrb[0].mxu0
      %575 = vmatprep.mubr.bf16.mxu0 0
      %576 = vmatmul.mubr.bf16.gmra.mrb[0].mxu0 %v407
      %v577 = vpop.f32.mrb[0].mxu0
      %v578 = vadd.f32 %v333, %v577
      %v579 = vpop.f32.mrb[0].mxu0
      %v580 = vpop.f32.mrb[0].mxu0
      %v581 = vadd.f32 %v333, %v580
      %v582 = vpop.f32.mrb[0].mxu0
      %583 = vmatprep.mubr.bf16.mxu0 0
      %584 = vmatmul.mubr.bf16.gmra.mrb[0].mxu0 %v408
      %v585 = vpop.f32.mrb[0].mxu0
      %v586 = vadd.f32 %v333, %v585
      %v587 = vpop.f32.mrb[0].mxu0
      %v588 = vpop.f32.mrb[0].mxu0
      %v589 = vadd.f32 %v333, %v588
      %v590 = vpop.f32.mrb[0].mxu0
      %591 = vmatprep.mubr.bf16.mxu0 0
      %592 = vmatmul.mubr.bf16.gmra.mrb[0].mxu0 %v409
      %v593 = vpop.f32.mrb[0].mxu0
      %v594 = vadd.f32 %v333, %v593
      %v595 = vpop.f32.mrb[0].mxu0
      %v596 = vpop.f32.mrb[0].mxu0
      %v597 = vadd.f32 %v333, %v596
      %v598 = vpop.f32.mrb[0].mxu0
      %599 = vmatprep.mubr.bf16.mxu0 0
      %600 = vmatmul.mubr.bf16.gmra.mrb[0].mxu0 %v410
      %v601 = vpop.f32.mrb[0].mxu0
      %v602 = vadd.f32 %v333, %v601
      %v603 = vpop.f32.mrb[0].mxu0
      %v604 = vpop.f32.mrb[0].mxu0
      %v605 = vadd.f32 %v333, %v604
      %v606 = vpop.f32.mrb[0].mxu0
      %607 = vmatprep.mubr.bf16.mxu0 0
      %608 = vmatmul.mubr.bf16.gmra.mrb[0].mxu0 %v411
      %v609 = vpop.f32.mrb[0].mxu0
      %v610 = vadd.f32 %v333, %v609
      %v611 = vpop.f32.mrb[0].mxu0
      %v612 = vpop.f32.mrb[0].mxu0
      %v613 = vadd.f32 %v333, %v612
      %v614 = vpop.f32.mrb[0].mxu0
      %615 = vmatprep.mubr.bf16.mxu0 0
      %616 = vmatmul.mubr.bf16.gmra.mrb[0].mxu0 %v412
      %v617 = vpop.f32.mrb[0].mxu0
      %v618 = vadd.f32 %v333, %v617
      %v619 = vpop.f32.mrb[0].mxu0
      %v620 = vpop.f32.mrb[0].mxu0
      %v621 = vadd.f32 %v333, %v620
      %v622 = vpop.f32.mrb[0].mxu0
      %623 = vmatprep.mubr.bf16.mxu0 0
      %624 = vmatmul.mubr.bf16.gmra.mrb[0].mxu0 %v413
      %v625 = vpop.f32.mrb[0].mxu0
      %v626 = vadd.f32 %v333, %v625
      %v627 = vpop.f32.mrb[0].mxu0
      %v628 = vpop.f32.mrb[0].mxu0
      %v629 = vadd.f32 %v333, %v628
      %v630 = vpop.f32.mrb[0].mxu0
      %631 = vmatprep.mubr.bf16.mxu0 0
      %632 = vmatmul.mubr.bf16.gmra.mrb[0].mxu0 %v414
      %v633 = vpop.f32.mrb[0].mxu0
      %v634 = vadd.f32 %v333, %v633
      %v635 = vpop.f32.mrb[0].mxu0
      %v636 = vpop.f32.mrb[0].mxu0
      %v637 = vadd.f32 %v333, %v636
      %v638 = vpop.f32.mrb[0].mxu0
      %639 = vdwg.mxu0
      %v640 = vmax.f32 %v514, 0.0
      %v641 = vmax.f32 %v517, 0.0
      %v642 = vmax.f32 %v522, 0.0
      %v643 = vmax.f32 %v525, 0.0
      %v644 = vmax.f32 %v530, 0.0
      %v645 = vmax.f32 %v533, 0.0
      %v646 = vmax.f32 %v538, 0.0
      %v647 = vmax.f32 %v541, 0.0
      %v648 = vmax.f32 %v546, 0.0
      %v649 = vmax.f32 %v549, 0.0
      %v650 = vmax.f32 %v554, 0.0
      %v651 = vmax.f32 %v557, 0.0
      %v652 = vmax.f32 %v562, 0.0
      %v653 = vmax.f32 %v565, 0.0
      %v654 = vmax.f32 %v570, 0.0
      %v655 = vmax.f32 %v573, 0.0
      %v656 = vmax.f32 %v578, 0.0
      %v657 = vmax.f32 %v581, 0.0
      %v658 = vmax.f32 %v586, 0.0
      %v659 = vmax.f32 %v589, 0.0
      %v660 = vmax.f32 %v594, 0.0
      %v661 = vmax.f32 %v597, 0.0
      %v662 = vmax.f32 %v602, 0.0
      %v663 = vmax.f32 %v605, 0.0
      %v664 = vmax.f32 %v610, 0.0
      %v665 = vmax.f32 %v613, 0.0
      %v666 = vmax.f32 %v618, 0.0
      %v667 = vmax.f32 %v621, 0.0
      %v668 = vmax.f32 %v626, 0.0
      %v669 = vmax.f32 %v629, 0.0
      %v670 = vmax.f32 %v634, 0.0
      %v671 = vmax.f32 %v637, 0.0
      %v672 = vpack.c.bf16 %v641, %v640
      %v673 = vpack.c.bf16 %v643, %v642
      %v674 = vpack.c.bf16 %v645, %v644
      %v675 = vpack.c.bf16 %v647, %v646
      %v676 = vpack.c.bf16 %v649, %v648
      %v677 = vpack.c.bf16 %v651, %v650
      %v678 = vpack.c.bf16 %v653, %v652
      %v679 = vpack.c.bf16 %v655, %v654
      %v680 = vpack.c.bf16 %v657, %v656
      %v681 = vpack.c.bf16 %v659, %v658
      %v682 = vpack.c.bf16 %v661, %v660
      %v683 = vpack.c.bf16 %v663, %v662
      %v684 = vpack.c.bf16 %v665, %v664
      %v685 = vpack.c.bf16 %v667, %v666
      %v686 = vpack.c.bf16 %v669, %v668
      %v687 = vpack.c.bf16 %v671, %v670
      %v689 = vshrl.u32 0, 16
      %v691 = vrot.slane %v689, 7
      %v692 = vshll.u32 0, 16
      %v694 = vor.u32 %v691, %v692
      %v696 = vshrl.u32 %v672, 16
      %v698 = vrot.slane %v696, 7
      %v699 = vshll.u32 %v672, 16
      %v701 = vor.u32 %v698, %v699
      %v703 = vshrl.u32 %v673, 16
      %v705 = vrot.slane %v703, 7
      %v706 = vshll.u32 %v673, 16
      %v708 = vor.u32 %v705, %v706
      %v710 = vshrl.u32 %v674, 16
      %v712 = vrot.slane %v710, 7
      %v713 = vshll.u32 %v674, 16
      %v715 = vor.u32 %v712, %v713
      %v717 = vshrl.u32 %v675, 16
      %v719 = vrot.slane %v717, 7
      %v720 = vshll.u32 %v675, 16
      %v722 = vor.u32 %v719, %v720
      %v724 = vshrl.u32 %v676, 16
      %v726 = vrot.slane %v724, 7
      %v727 = vshll.u32 %v676, 16
      %v729 = vor.u32 %v726, %v727
      %v731 = vshrl.u32 %v677, 16
      %v733 = vrot.slane %v731, 7
      %v734 = vshll.u32 %v677, 16
      %v736 = vor.u32 %v733, %v734
      %v738 = vshrl.u32 %v678, 16
      %v740 = vrot.slane %v738, 7
      %v741 = vshll.u32 %v678, 16
      %v743 = vor.u32 %v740, %v741
      %v745 = vshrl.u32 %v679, 16
      %v747 = vrot.slane %v745, 7
      %v748 = vshll.u32 %v679, 16
      %v750 = vor.u32 %v747, %v748
      %v752 = vshrl.u32 %v680, 16
      %v754 = vrot.slane %v752, 7
      %v755 = vshll.u32 %v680, 16
      %v757 = vor.u32 %v754, %v755
      %v759 = vshrl.u32 %v681, 16
      %v761 = vrot.slane %v759, 7
      %v762 = vshll.u32 %v681, 16
      %v764 = vor.u32 %v761, %v762
      %v766 = vshrl.u32 %v682, 16
      %v768 = vrot.slane %v766, 7
      %v769 = vshll.u32 %v682, 16
      %v771 = vor.u32 %v768, %v769
      %v773 = vshrl.u32 %v683, 16
      %v775 = vrot.slane %v773, 7
      %v776 = vshll.u32 %v683, 16
      %v778 = vor.u32 %v775, %v776
      %v780 = vshrl.u32 %v684, 16
      %v782 = vrot.slane %v780, 7
      %v783 = vshll.u32 %v684, 16
      %v785 = vor.u32 %v782, %v783
      %v787 = vshrl.u32 %v685, 16
      %v789 = vrot.slane %v787, 7
      %v790 = vshll.u32 %v685, 16
      %v792 = vor.u32 %v789, %v790
      %v794 = vshrl.u32 %v686, 16
      %v796 = vrot.slane %v794, 7
      %v797 = vshll.u32 %v686, 16
      %v799 = vor.u32 %v796, %v797
      %v801 = vshrl.u32 %v687, 16
      %v803 = vrot.slane %v801, 7
      %v804 = vshll.u32 %v687, 16
      %v806 = vor.u32 %v803, %v804
      %vm841 = vcmask 1040384
      %vm842 = vsmask.f32 256
      %vm843 = vmand %vm841, %vm842
      %v844 = vsel %vm843, 0, %v694
      %v845 = vsel %vm843, 0, %v701
      %v846 = vsel %vm843, 0, %v708
      %v847 = vsel %vm843, 0, %v715
      %v848 = vsel %vm843, 0, %v722
      %v849 = vsel %vm843, 0, %v729
      %v850 = vsel %vm843, 0, %v736
      %v851 = vsel %vm843, 0, %v743
      %v852 = vsel %vm843, 0, %v750
      %v853 = vsel %vm843, 0, %v757
      %v854 = vsel %vm843, 0, %v764
      %v855 = vsel %vm843, 0, %v771
      %v856 = vsel %vm843, 0, %v778
      %v857 = vsel %vm843, 0, %v785
      %v858 = vsel %vm843, 0, %v792
      %v859 = vsel %vm843, 0, %v799
      %v860 = vsel %vm843, 0, %v806
      %v861 = vsel %vm843, %v691, 0
      %v862 = vsel %vm843, %v698, 0
      %v863 = vsel %vm843, %v705, 0
      %v864 = vsel %vm843, %v712, 0
      %v865 = vsel %vm843, %v719, 0
      %v866 = vsel %vm843, %v726, 0
      %v867 = vsel %vm843, %v733, 0
      %v868 = vsel %vm843, %v740, 0
      %v869 = vsel %vm843, %v747, 0
      %v870 = vsel %vm843, %v754, 0
      %v871 = vsel %vm843, %v761, 0
      %v872 = vsel %vm843, %v768, 0
      %v873 = vsel %vm843, %v775, 0
      %v874 = vsel %vm843, %v782, 0
      %v875 = vsel %vm843, %v789, 0
      %v876 = vsel %vm843, %v796, 0
      %v877 = vsel %vm843, %v803, 0
      %vm878 = vsmask.f32 7424
      %v880 = vshrl.u32 %v844, 16
      %v882 = vshll.u32 %v844, 16
      %v884 = vrot.slane %v882, 1
      %v885 = vor.u32 %v880, %v884
      %v887 = vshll.u32 %v861, 16
      %v889 = vrot.slane %v887, 1
      %v890 = vsel %vm878, %v885, %v889
      %v892 = vshrl.u32 %v845, 16
      %v894 = vshll.u32 %v845, 16
      %v896 = vrot.slane %v894, 1
      %v897 = vor.u32 %v892, %v896
      %v899 = vshll.u32 %v862, 16
      %v901 = vrot.slane %v899, 1
      %v902 = vsel %vm878, %v897, %v901
      %v904 = vshrl.u32 %v846, 16
      %v906 = vshll.u32 %v846, 16
      %v908 = vrot.slane %v906, 1
      %v909 = vor.u32 %v904, %v908
      %v911 = vshll.u32 %v863, 16
      %v913 = vrot.slane %v911, 1
      %v914 = vsel %vm878, %v909, %v913
      %v916 = vshrl.u32 %v847, 16
      %v918 = vshll.u32 %v847, 16
      %v920 = vrot.slane %v918, 1
      %v921 = vor.u32 %v916, %v920
      %v923 = vshll.u32 %v864, 16
      %v925 = vrot.slane %v923, 1
      %v926 = vsel %vm878, %v921, %v925
      %v928 = vshrl.u32 %v848, 16
      %v930 = vshll.u32 %v848, 16
      %v932 = vrot.slane %v930, 1
      %v933 = vor.u32 %v928, %v932
      %v935 = vshll.u32 %v865, 16
      %v937 = vrot.slane %v935, 1
      %v938 = vsel %vm878, %v933, %v937
      %v940 = vshrl.u32 %v849, 16
      %v942 = vshll.u32 %v849, 16
      %v944 = vrot.slane %v942, 1
      %v945 = vor.u32 %v940, %v944
      %v947 = vshll.u32 %v866, 16
      %v949 = vrot.slane %v947, 1
      %v950 = vsel %vm878, %v945, %v949
      %v952 = vshrl.u32 %v850, 16
      %v954 = vshll.u32 %v850, 16
      %v956 = vrot.slane %v954, 1
      %v957 = vor.u32 %v952, %v956
      %v959 = vshll.u32 %v867, 16
      %v961 = vrot.slane %v959, 1
      %v962 = vsel %vm878, %v957, %v961
      %v964 = vshrl.u32 %v851, 16
      %v966 = vshll.u32 %v851, 16
      %v968 = vrot.slane %v966, 1
      %v969 = vor.u32 %v964, %v968
      %v971 = vshll.u32 %v868, 16
      %v973 = vrot.slane %v971, 1
      %v974 = vsel %vm878, %v969, %v973
      %v976 = vshrl.u32 %v852, 16
      %v978 = vshll.u32 %v852, 16
      %v980 = vrot.slane %v978, 1
      %v981 = vor.u32 %v976, %v980
      %v983 = vshll.u32 %v869, 16
      %v985 = vrot.slane %v983, 1
      %v986 = vsel %vm878, %v981, %v985
      %v988 = vshrl.u32 %v853, 16
      %v990 = vshll.u32 %v853, 16
      %v992 = vrot.slane %v990, 1
      %v993 = vor.u32 %v988, %v992
      %v995 = vshll.u32 %v870, 16
      %v997 = vrot.slane %v995, 1
      %v998 = vsel %vm878, %v993, %v997
      %v1000 = vshrl.u32 %v854, 16
      %v1002 = vshll.u32 %v854, 16
      %v1004 = vrot.slane %v1002, 1
      %v1005 = vor.u32 %v1000, %v1004
      %v1007 = vshll.u32 %v871, 16
      %v1009 = vrot.slane %v1007, 1
      %v1010 = vsel %vm878, %v1005, %v1009
      %v1012 = vshrl.u32 %v855, 16
      %v1014 = vshll.u32 %v855, 16
      %v1016 = vrot.slane %v1014, 1
      %v1017 = vor.u32 %v1012, %v1016
      %v1019 = vshll.u32 %v872, 16
      %v1021 = vrot.slane %v1019, 1
      %v1022 = vsel %vm878, %v1017, %v1021
      %v1024 = vshrl.u32 %v856, 16
      %v1026 = vshll.u32 %v856, 16
      %v1028 = vrot.slane %v1026, 1
      %v1029 = vor.u32 %v1024, %v1028
      %v1031 = vshll.u32 %v873, 16
      %v1033 = vrot.slane %v1031, 1
      %v1034 = vsel %vm878, %v1029, %v1033
      %v1036 = vshrl.u32 %v857, 16
      %v1038 = vshll.u32 %v857, 16
      %v1040 = vrot.slane %v1038, 1
      %v1041 = vor.u32 %v1036, %v1040
      %v1043 = vshll.u32 %v874, 16
      %v1045 = vrot.slane %v1043, 1
      %v1046 = vsel %vm878, %v1041, %v1045
      %v1048 = vshrl.u32 %v858, 16
      %v1050 = vshll.u32 %v858, 16
      %v1052 = vrot.slane %v1050, 1
      %v1053 = vor.u32 %v1048, %v1052
      %v1055 = vshll.u32 %v875, 16
      %v1057 = vrot.slane %v1055, 1
      %v1058 = vsel %vm878, %v1053, %v1057
      %v1060 = vshrl.u32 %v859, 16
      %v1062 = vshll.u32 %v859, 16
      %v1064 = vrot.slane %v1062, 1
      %v1065 = vor.u32 %v1060, %v1064
      %v1067 = vshll.u32 %v876, 16
      %v1069 = vrot.slane %v1067, 1
      %v1070 = vsel %vm878, %v1065, %v1069
      %v1072 = vshrl.u32 %v860, 16
      %v1074 = vshll.u32 %v860, 16
      %v1076 = vrot.slane %v1074, 1
      %v1077 = vor.u32 %v1072, %v1076
      %v1079 = vshll.u32 %v877, 16
      %v1081 = vrot.slane %v1079, 1
      %v1082 = vsel %vm878, %v1077, %v1081
      %vm1134 = vcmask 1046528
      %v1135 = vrot.slane %v844, 1
      %v1136 = vrot.slane %v861, 1
      %v1137 = vsel %vm1134, %v1135, %v1136
      %v1138 = vrot.slane %v845, 1
      %v1139 = vrot.slane %v862, 1
      %v1140 = vsel %vm1134, %v1138, %v1139
      %v1141 = vrot.slane %v846, 1
      %v1142 = vrot.slane %v863, 1
      %v1143 = vsel %vm1134, %v1141, %v1142
      %v1144 = vrot.slane %v847, 1
      %v1145 = vrot.slane %v864, 1
      %v1146 = vsel %vm1134, %v1144, %v1145
      %v1147 = vrot.slane %v848, 1
      %v1148 = vrot.slane %v865, 1
      %v1149 = vsel %vm1134, %v1147, %v1148
      %v1150 = vrot.slane %v849, 1
      %v1151 = vrot.slane %v866, 1
      %v1152 = vsel %vm1134, %v1150, %v1151
      %v1153 = vrot.slane %v850, 1
      %v1154 = vrot.slane %v867, 1
      %v1155 = vsel %vm1134, %v1153, %v1154
      %v1156 = vrot.slane %v851, 1
      %v1157 = vrot.slane %v868, 1
      %v1158 = vsel %vm1134, %v1156, %v1157
      %v1159 = vrot.slane %v852, 1
      %v1160 = vrot.slane %v869, 1
      %v1161 = vsel %vm1134, %v1159, %v1160
      %v1162 = vrot.slane %v853, 1
      %v1163 = vrot.slane %v870, 1
      %v1164 = vsel %vm1134, %v1162, %v1163
      %v1165 = vrot.slane %v854, 1
      %v1166 = vrot.slane %v871, 1
      %v1167 = vsel %vm1134, %v1165, %v1166
      %v1168 = vrot.slane %v855, 1
      %v1169 = vrot.slane %v872, 1
      %v1170 = vsel %vm1134, %v1168, %v1169
      %v1171 = vrot.slane %v856, 1
      %v1172 = vrot.slane %v873, 1
      %v1173 = vsel %vm1134, %v1171, %v1172
      %v1174 = vrot.slane %v857, 1
      %v1175 = vrot.slane %v874, 1
      %v1176 = vsel %vm1134, %v1174, %v1175
      %v1177 = vrot.slane %v858, 1
      %v1178 = vrot.slane %v875, 1
      %v1179 = vsel %vm1134, %v1177, %v1178
      %v1180 = vrot.slane %v859, 1
      %v1181 = vrot.slane %v876, 1
      %v1182 = vsel %vm1134, %v1180, %v1181
      %v1183 = vrot.slane %v860, 1
      %v1184 = vrot.slane %v877, 1
      %v1185 = vsel %vm1134, %v1183, %v1184
      %v1203 = vld [vmem:[%s2] sm:$0xf]
      %v1204 = vld [vmem:[%s2 + $0x4] sm:$0xf]
      %v1205 = vld [vmem:[%s2 + $0x8] sm:$0xf]
      %v1206 = vld [vmem:[%s2 + $0xc] sm:$0xf]
      %v1207 = vld [vmem:[%s2 + $0x10] sm:$0xf]
      %v1208 = vld [vmem:[%s2 + $0x14] sm:$0xf]
      %v1209 = vld [vmem:[%s2 + $0x18] sm:$0xf]
      %v1210 = vld [vmem:[%s2 + $0x1c] sm:$0xf]
      %v1211 = vld [vmem:[%s2 + $0x20] sm:$0xf]
      %v1212 = vld [vmem:[%s2 + $0x24] sm:$0xf]
      %v1213 = vld [vmem:[%s2 + $0x28] sm:$0xf]
      %v1214 = vld [vmem:[%s2 + $0x2c] sm:$0xf]
      %v1215 = vld [vmem:[%s2 + $0x30] sm:$0xf]
      %v1216 = vld [vmem:[%s2 + $0x34] sm:$0xf]
      %v1217 = vld [vmem:[%s2 + $0x38] sm:$0xf]
      %v1218 = vld [vmem:[%s2 + $0x3c] sm:$0xf]
      %v1219 = vld [vmem:[%s2 + $0x40] sm:$0xf]
      %v1220 = vld [vmem:[%s2 + $0x44] sm:$0xf]
      %v1221 = vld [vmem:[%s2 + $0x48] sm:$0xf]
      %v1222 = vld [vmem:[%s2 + $0x4c] sm:$0xf]
      %v1223 = vld [vmem:[%s2 + $0x50] sm:$0xf]
      %v1224 = vld [vmem:[%s2 + $0x54] sm:$0xf]
      %v1225 = vld [vmem:[%s2 + $0x58] sm:$0xf]
      %v1226 = vld [vmem:[%s2 + $0x5c] sm:$0xf]
      %v1227 = vld [vmem:[%s2 + $0x60] sm:$0xf]
      %v1228 = vld [vmem:[%s2 + $0x64] sm:$0xf]
      %v1229 = vld [vmem:[%s2 + $0x68] sm:$0xf]
      %v1230 = vld [vmem:[%s2 + $0x6c] sm:$0xf]
      %v1231 = vld [vmem:[%s2 + $0x70] sm:$0xf]
      %v1232 = vld [vmem:[%s2 + $0x74] sm:$0xf]
      %v1233 = vld [vmem:[%s2 + $0x78] sm:$0xf]
      %v1234 = vld [vmem:[%s2 + $0x7c] sm:$0xf]
      %v1235 = vld [vmem:[%s2 + $0x80] sm:$0xf]
      %v1236 = vld [vmem:[%s2 + $0x84] sm:$0xf]
      %v1237 = vld [vmem:[%s2 + $0x88] sm:$0xf]
      %v1238 = vld [vmem:[%s2 + $0x8c] sm:$0xf]
      %v1239 = vld [vmem:[%s2 + $0x90] sm:$0xf]
      %v1240 = vld [vmem:[%s2 + $0x94] sm:$0xf]
      %v1241 = vld [vmem:[%s2 + $0x98] sm:$0xf]
      %v1242 = vld [vmem:[%s2 + $0x9c] sm:$0xf]
      %v1243 = vld [vmem:[%s2 + $0xa0] sm:$0xf]
      %v1244 = vld [vmem:[%s2 + $0xa4] sm:$0xf]
      %v1245 = vld [vmem:[%s2 + $0xa8] sm:$0xf]
      %v1246 = vld [vmem:[%s2 + $0xac] sm:$0xf]
      %v1247 = vld [vmem:[%s2 + $0xb0] sm:$0xf]
      %v1248 = vld [vmem:[%s2 + $0xb4] sm:$0xf]
      %v1249 = vld [vmem:[%s2 + $0xb8] sm:$0xf]
      %v1250 = vld [vmem:[%s2 + $0xbc] sm:$0xf]
      %v1251 = vld [vmem:[%s2 + $0xc0] sm:$0xf]
      %v1252 = vld [vmem:[%s2 + $0xc4] sm:$0xf]
      %v1253 = vld [vmem:[%s2 + $0xc8] sm:$0xf]
      %v1254 = vld [vmem:[%s2 + $0xcc] sm:$0xf]
      %v1255 = vld [vmem:[%s2 + $0xd0] sm:$0xf]
      %v1256 = vld [vmem:[%s2 + $0xd4] sm:$0xf]
      %v1257 = vld [vmem:[%s2 + $0xd8] sm:$0xf]
      %v1258 = vld [vmem:[%s2 + $0xdc] sm:$0xf]
      %v1259 = vld [vmem:[%s2 + $0xe0] sm:$0xf]
      %v1260 = vld [vmem:[%s2 + $0xe4] sm:$0xf]
      %v1261 = vld [vmem:[%s2 + $0xe8] sm:$0xf]
      %v1262 = vld [vmem:[%s2 + $0xec] sm:$0xf]
      %v1263 = vld [vmem:[%s2 + $0xf0] sm:$0xf]
      %v1264 = vld [vmem:[%s2 + $0xf4] sm:$0xf]
      %v1265 = vld [vmem:[%s2 + $0xf8] sm:$0xf]
      %v1266 = vld [vmem:[%s2 + $0xfc] sm:$0xf]
      %v1267 = vld [vmem:[%s2 + $0x100] sm:$0xf]
      %v1268 = vld [vmem:[%s2 + $0x104] sm:$0xf]
      %v1269 = vld [vmem:[%s2 + $0x108] sm:$0xf]
      %v1270 = vld [vmem:[%s2 + $0x10c] sm:$0xf]
      %v1271 = vld [vmem:[%s2 + $0x110] sm:$0xf]
      %v1272 = vld [vmem:[%s2 + $0x114] sm:$0xf]
      %v1273 = vld [vmem:[%s2 + $0x118] sm:$0xf]
      %v1274 = vld [vmem:[%s2 + $0x11c] sm:$0xf]
      %v1275 = vld [vmem:[%s2 + $0x120] sm:$0xf]
      %v1276 = vld [vmem:[%s2 + $0x124] sm:$0xf]
      %v1277 = vld [vmem:[%s2 + $0x128] sm:$0xf]
      %v1278 = vld [vmem:[%s2 + $0x12c] sm:$0xf]
      %v1279 = vld [vmem:[%s2 + $0x130] sm:$0xf]
      %v1280 = vld [vmem:[%s2 + $0x134] sm:$0xf]
      %v1281 = vld [vmem:[%s2 + $0x138] sm:$0xf]
      %v1282 = vld [vmem:[%s2 + $0x13c] sm:$0xf]
      %v1283 = vld [vmem:[%s2 + $0x140] sm:$0xf]
      %v1284 = vld [vmem:[%s2 + $0x144] sm:$0xf]
      %v1285 = vld [vmem:[%s2 + $0x148] sm:$0xf]
      %v1286 = vld [vmem:[%s2 + $0x14c] sm:$0xf]
      %v1287 = vld [vmem:[%s2 + $0x150] sm:$0xf]
      %v1288 = vld [vmem:[%s2 + $0x154] sm:$0xf]
      %v1289 = vld [vmem:[%s2 + $0x158] sm:$0xf]
      %v1290 = vld [vmem:[%s2 + $0x15c] sm:$0xf]
      %v1291 = vld [vmem:[%s2 + $0x160] sm:$0xf]
      %v1292 = vld [vmem:[%s2 + $0x164] sm:$0xf]
      %v1293 = vld [vmem:[%s2 + $0x168] sm:$0xf]
      %v1294 = vld [vmem:[%s2 + $0x16c] sm:$0xf]
      %v1295 = vld [vmem:[%s2 + $0x170] sm:$0xf]
      %v1296 = vld [vmem:[%s2 + $0x174] sm:$0xf]
      %v1297 = vld [vmem:[%s2 + $0x178] sm:$0xf]
      %v1298 = vld [vmem:[%s2 + $0x17c] sm:$0xf]
      %v1299 = vld [vmem:[%s2 + $0x180] sm:$0xf]
      %v1300 = vld [vmem:[%s2 + $0x184] sm:$0xf]
      %v1301 = vld [vmem:[%s2 + $0x188] sm:$0xf]
      %v1302 = vld [vmem:[%s2 + $0x18c] sm:$0xf]
      %v1303 = vld [vmem:[%s2 + $0x190] sm:$0xf]
      %v1304 = vld [vmem:[%s2 + $0x194] sm:$0xf]
      %v1305 = vld [vmem:[%s2 + $0x198] sm:$0xf]
      %v1306 = vld [vmem:[%s2 + $0x19c] sm:$0xf]
      %v1307 = vld [vmem:[%s2 + $0x1a0] sm:$0xf]
      %v1308 = vld [vmem:[%s2 + $0x1a4] sm:$0xf]
      %v1309 = vld [vmem:[%s2 + $0x1a8] sm:$0xf]
      %v1310 = vld [vmem:[%s2 + $0x1ac] sm:$0xf]
      %v1311 = vld [vmem:[%s2 + $0x1b0] sm:$0xf]
      %v1312 = vld [vmem:[%s2 + $0x1b4] sm:$0xf]
      %v1313 = vld [vmem:[%s2 + $0x1b8] sm:$0xf]
      %v1314 = vld [vmem:[%s2 + $0x1bc] sm:$0xf]
      %v1315 = vld [vmem:[%s2 + $0x1c0] sm:$0xf]
      %v1316 = vld [vmem:[%s2 + $0x1c4] sm:$0xf]
      %v1317 = vld [vmem:[%s2 + $0x1c8] sm:$0xf]
      %v1318 = vld [vmem:[%s2 + $0x1cc] sm:$0xf]
      %v1319 = vld [vmem:[%s2 + $0x1d0] sm:$0xf]
      %v1320 = vld [vmem:[%s2 + $0x1d4] sm:$0xf]
      %v1321 = vld [vmem:[%s2 + $0x1d8] sm:$0xf]
      %v1322 = vld [vmem:[%s2 + $0x1dc] sm:$0xf]
      %v1323 = vld [vmem:[%s2 + $0x1e0] sm:$0xf]
      %v1324 = vld [vmem:[%s2 + $0x1e4] sm:$0xf]
      %v1325 = vld [vmem:[%s2 + $0x1e8] sm:$0xf]
      %v1326 = vld [vmem:[%s2 + $0x1ec] sm:$0xf]
      %v1327 = vld [vmem:[%s2 + $0x1f0] sm:$0xf]
      %v1328 = vld [vmem:[%s2 + $0x1f4] sm:$0xf]
      %v1329 = vld [vmem:[%s2 + $0x1f8] sm:$0xf]
      %v1330 = vld [vmem:[%s2 + $0x1fc] sm:$0xf]
      %v1331 = vld [vmem:[%s2 + $0x200] sm:$0xf]
      %v1332 = vld [vmem:[%s2 + $0x204] sm:$0xf]
      %v1333 = vld [vmem:[%s2 + $0x208] sm:$0xf]
      %v1334 = vld [vmem:[%s2 + $0x20c] sm:$0xf]
      %v1335 = vld [vmem:[%s2 + $0x210] sm:$0xf]
      %v1336 = vld [vmem:[%s2 + $0x214] sm:$0xf]
      %v1337 = vld [vmem:[%s2 + $0x218] sm:$0xf]
      %v1338 = vld [vmem:[%s2 + $0x21c] sm:$0xf]
      %v1339 = vld [vmem:[%s2 + $0x220] sm:$0xf]
      %v1340 = vld [vmem:[%s2 + $0x224] sm:$0xf]
      %v1341 = vld [vmem:[%s2 + $0x228] sm:$0xf]
      %v1342 = vld [vmem:[%s2 + $0x22c] sm:$0xf]
      %v1343 = vld [vmem:[%s2 + $0x230] sm:$0xf]
      %v1344 = vld [vmem:[%s2 + $0x234] sm:$0xf]
      %v1345 = vld [vmem:[%s2 + $0x238] sm:$0xf]
      %v1346 = vld [vmem:[%s2 + $0x23c] sm:$0xf]
      %v1347 = vld [vmem:[%s5] sm:$0x1]
      %v1349 = vlaneseq
      %v1350 = vshrl.u32 %v1349, 7
      %v1351 = vsub.s32 0, %v1350
      %v1352 = vrot.slane %v1347, %v1351
      %v1498 = vunpack.c.l.b16 %v1203
      %v1499 = vunpack.c.l.b16 %v1204
      %v1500 = vunpack.c.l.b16 %v1205
      %v1501 = vunpack.c.l.b16 %v1206
      %v1502 = vunpack.c.l.b16 %v1207
      %v1503 = vunpack.c.l.b16 %v1208
      %v1504 = vunpack.c.l.b16 %v1209
      %v1505 = vunpack.c.l.b16 %v1210
      %v1506 = vunpack.c.l.b16 %v1211
      %v1507 = vunpack.c.l.b16 %v1212
      %v1508 = vunpack.c.l.b16 %v1213
      %v1509 = vunpack.c.l.b16 %v1214
      %v1510 = vunpack.c.l.b16 %v1215
      %v1511 = vunpack.c.l.b16 %v1216
      %v1512 = vunpack.c.l.b16 %v1217
      %v1513 = vunpack.c.l.b16 %v1218
      %v1514 = vunpack.c.l.b16 %v1219
      %v1515 = vunpack.c.l.b16 %v1220
      %v1516 = vunpack.c.l.b16 %v1221
      %v1517 = vunpack.c.l.b16 %v1222
      %v1518 = vunpack.c.l.b16 %v1223
      %v1519 = vunpack.c.l.b16 %v1224
      %v1520 = vunpack.c.l.b16 %v1225
      %v1521 = vunpack.c.l.b16 %v1226
      %v1522 = vunpack.c.l.b16 %v1227
      %v1523 = vunpack.c.l.b16 %v1228
      %v1524 = vunpack.c.l.b16 %v1229
      %v1525 = vunpack.c.l.b16 %v1230
      %v1526 = vunpack.c.l.b16 %v1231
      %v1527 = vunpack.c.l.b16 %v1232
      %v1528 = vunpack.c.l.b16 %v1233
      %v1529 = vunpack.c.l.b16 %v1234
      %v1530 = vunpack.c.l.b16 %v1235
      %v1531 = vunpack.c.l.b16 %v1236
      %v1532 = vunpack.c.l.b16 %v1237
      %v1533 = vunpack.c.l.b16 %v1238
      %v1534 = vunpack.c.l.b16 %v1239
      %v1535 = vunpack.c.l.b16 %v1240
      %v1536 = vunpack.c.l.b16 %v1241
      %v1537 = vunpack.c.l.b16 %v1242
      %v1538 = vunpack.c.l.b16 %v1243
      %v1539 = vunpack.c.l.b16 %v1244
      %v1540 = vunpack.c.l.b16 %v1245
      %v1541 = vunpack.c.l.b16 %v1246
      %v1542 = vunpack.c.l.b16 %v1247
      %v1543 = vunpack.c.l.b16 %v1248
      %v1544 = vunpack.c.l.b16 %v1249
      %v1545 = vunpack.c.l.b16 %v1250
      %v1546 = vunpack.c.l.b16 %v1251
      %v1547 = vunpack.c.l.b16 %v1252
      %v1548 = vunpack.c.l.b16 %v1253
      %v1549 = vunpack.c.l.b16 %v1254
      %v1550 = vunpack.c.l.b16 %v1255
      %v1551 = vunpack.c.l.b16 %v1256
      %v1552 = vunpack.c.l.b16 %v1257
      %v1553 = vunpack.c.l.b16 %v1258
      %v1554 = vunpack.c.l.b16 %v1259
      %v1555 = vunpack.c.l.b16 %v1260
      %v1556 = vunpack.c.l.b16 %v1261
      %v1557 = vunpack.c.l.b16 %v1262
      %v1558 = vunpack.c.l.b16 %v1263
      %v1559 = vunpack.c.l.b16 %v1264
      %v1560 = vunpack.c.l.b16 %v1265
      %v1561 = vunpack.c.l.b16 %v1266
      %v1562 = vunpack.c.l.b16 %v1267
      %v1563 = vunpack.c.l.b16 %v1268
      %v1564 = vunpack.c.l.b16 %v1269
      %v1565 = vunpack.c.l.b16 %v1270
      %v1566 = vunpack.c.l.b16 %v1271
      %v1567 = vunpack.c.l.b16 %v1272
      %v1568 = vunpack.c.l.b16 %v1273
      %v1569 = vunpack.c.l.b16 %v1274
      %v1570 = vunpack.c.l.b16 %v1275
      %v1571 = vunpack.c.l.b16 %v1276
      %v1572 = vunpack.c.l.b16 %v1277
      %v1573 = vunpack.c.l.b16 %v1278
      %v1574 = vunpack.c.l.b16 %v1279
      %v1575 = vunpack.c.l.b16 %v1280
      %v1576 = vunpack.c.l.b16 %v1281
      %v1577 = vunpack.c.l.b16 %v1282
      %v1578 = vunpack.c.l.b16 %v1283
      %v1579 = vunpack.c.l.b16 %v1284
      %v1580 = vunpack.c.l.b16 %v1285
      %v1581 = vunpack.c.l.b16 %v1286
      %v1582 = vunpack.c.l.b16 %v1287
      %v1583 = vunpack.c.l.b16 %v1288
      %v1584 = vunpack.c.l.b16 %v1289
      %v1585 = vunpack.c.l.b16 %v1290
      %v1586 = vunpack.c.l.b16 %v1291
      %v1587 = vunpack.c.l.b16 %v1292
      %v1588 = vunpack.c.l.b16 %v1293
      %v1589 = vunpack.c.l.b16 %v1294
      %v1590 = vunpack.c.l.b16 %v1295
      %v1591 = vunpack.c.l.b16 %v1296
      %v1592 = vunpack.c.l.b16 %v1297
      %v1593 = vunpack.c.l.b16 %v1298
      %v1594 = vunpack.c.l.b16 %v1299
      %v1595 = vunpack.c.l.b16 %v1300
      %v1596 = vunpack.c.l.b16 %v1301
      %v1597 = vunpack.c.l.b16 %v1302
      %v1598 = vunpack.c.l.b16 %v1303
      %v1599 = vunpack.c.l.b16 %v1304
      %v1600 = vunpack.c.l.b16 %v1305
      %v1601 = vunpack.c.l.b16 %v1306
      %v1602 = vunpack.c.l.b16 %v1307
      %v1603 = vunpack.c.l.b16 %v1308
      %v1604 = vunpack.c.l.b16 %v1309
      %v1605 = vunpack.c.l.b16 %v1310
      %v1606 = vunpack.c.l.b16 %v1311
      %v1607 = vunpack.c.l.b16 %v1312
      %v1608 = vunpack.c.l.b16 %v1313
      %v1609 = vunpack.c.l.b16 %v1314
      %v1610 = vunpack.c.l.b16 %v1315
      %v1611 = vunpack.c.l.b16 %v1316
      %v1612 = vunpack.c.l.b16 %v1317
      %v1613 = vunpack.c.l.b16 %v1318
      %v1614 = vunpack.c.l.b16 %v1319
      %v1615 = vunpack.c.l.b16 %v1320
      %v1616 = vunpack.c.l.b16 %v1321
      %v1617 = vunpack.c.l.b16 %v1322
      %v1618 = vunpack.c.l.b16 %v1323
      %v1619 = vunpack.c.l.b16 %v1324
      %v1620 = vunpack.c.l.b16 %v1325
      %v1621 = vunpack.c.l.b16 %v1326
      %v1622 = vunpack.c.l.b16 %v1327
      %v1623 = vunpack.c.l.b16 %v1328
      %v1624 = vunpack.c.l.b16 %v1329
      %v1625 = vunpack.c.l.b16 %v1330
      %v1626 = vunpack.c.l.b16 %v1331
      %v1627 = vunpack.c.l.b16 %v1332
      %v1628 = vunpack.c.l.b16 %v1333
      %v1629 = vunpack.c.l.b16 %v1334
      %v1630 = vunpack.c.l.b16 %v1335
      %v1631 = vunpack.c.l.b16 %v1336
      %v1632 = vunpack.c.l.b16 %v1337
      %v1633 = vunpack.c.l.b16 %v1338
      %v1634 = vunpack.c.l.b16 %v1339
      %v1635 = vunpack.c.l.b16 %v1340
      %v1636 = vunpack.c.l.b16 %v1341
      %v1637 = vunpack.c.l.b16 %v1342
      %v1638 = vunpack.c.l.b16 %v1343
      %v1639 = vunpack.c.l.b16 %v1344
      %v1640 = vunpack.c.l.b16 %v1345
      %v1641 = vunpack.c.l.b16 %v1346
      %v1642 = vpack.c.b16 %v1499, %v1498
      %v1643 = vpack.c.b16 %v1501, %v1500
      %v1644 = vpack.c.b16 %v1503, %v1502
      %v1645 = vpack.c.b16 %v1505, %v1504
      %v1646 = vpack.c.b16 %v1507, %v1506
      %v1647 = vpack.c.b16 %v1509, %v1508
      %v1648 = vpack.c.b16 %v1511, %v1510
      %v1649 = vpack.c.b16 %v1513, %v1512
      %v1650 = vpack.c.b16 %v1515, %v1514
      %v1651 = vpack.c.b16 %v1517, %v1516
      %v1652 = vpack.c.b16 %v1519, %v1518
      %v1653 = vpack.c.b16 %v1521, %v1520
      %v1654 = vpack.c.b16 %v1523, %v1522
      %v1655 = vpack.c.b16 %v1525, %v1524
      %v1656 = vpack.c.b16 %v1527, %v1526
      %v1657 = vpack.c.b16 %v1529, %v1528
      %v1658 = vpack.c.b16 %v1531, %v1530
      %v1659 = vpack.c.b16 %v1533, %v1532
      %v1660 = vpack.c.b16 %v1535, %v1534
      %v1661 = vpack.c.b16 %v1537, %v1536
      %v1662 = vpack.c.b16 %v1539, %v1538
      %v1663 = vpack.c.b16 %v1541, %v1540
      %v1664 = vpack.c.b16 %v1543, %v1542
      %v1665 = vpack.c.b16 %v1545, %v1544
      %v1666 = vpack.c.b16 %v1547, %v1546
      %v1667 = vpack.c.b16 %v1549, %v1548
      %v1668 = vpack.c.b16 %v1551, %v1550
      %v1669 = vpack.c.b16 %v1553, %v1552
      %v1670 = vpack.c.b16 %v1555, %v1554
      %v1671 = vpack.c.b16 %v1557, %v1556
      %v1672 = vpack.c.b16 %v1559, %v1558
      %v1673 = vpack.c.b16 %v1561, %v1560
      %v1674 = vpack.c.b16 %v1563, %v1562
      %v1675 = vpack.c.b16 %v1565, %v1564
      %v1676 = vpack.c.b16 %v1567, %v1566
      %v1677 = vpack.c.b16 %v1569, %v1568
      %v1678 = vpack.c.b16 %v1571, %v1570
      %v1679 = vpack.c.b16 %v1573, %v1572
      %v1680 = vpack.c.b16 %v1575, %v1574
      %v1681 = vpack.c.b16 %v1577, %v1576
      %v1682 = vpack.c.b16 %v1579, %v1578
      %v1683 = vpack.c.b16 %v1581, %v1580
      %v1684 = vpack.c.b16 %v1583, %v1582
      %v1685 = vpack.c.b16 %v1585, %v1584
      %v1686 = vpack.c.b16 %v1587, %v1586
      %v1687 = vpack.c.b16 %v1589, %v1588
      %v1688 = vpack.c.b16 %v1591, %v1590
      %v1689 = vpack.c.b16 %v1593, %v1592
      %v1690 = vpack.c.b16 %v1595, %v1594
      %v1691 = vpack.c.b16 %v1597, %v1596
      %v1692 = vpack.c.b16 %v1599, %v1598
      %v1693 = vpack.c.b16 %v1601, %v1600
      %v1694 = vpack.c.b16 %v1603, %v1602
      %v1695 = vpack.c.b16 %v1605, %v1604
      %v1696 = vpack.c.b16 %v1607, %v1606
      %v1697 = vpack.c.b16 %v1609, %v1608
      %v1698 = vpack.c.b16 %v1611, %v1610
      %v1699 = vpack.c.b16 %v1613, %v1612
      %v1700 = vpack.c.b16 %v1615, %v1614
      %v1701 = vpack.c.b16 %v1617, %v1616
      %v1702 = vpack.c.b16 %v1619, %v1618
      %v1703 = vpack.c.b16 %v1621, %v1620
      %v1704 = vpack.c.b16 %v1623, %v1622
      %v1705 = vpack.c.b16 %v1625, %v1624
      %v1706 = vpack.c.b16 %v1627, %v1626
      %v1707 = vpack.c.b16 %v1629, %v1628
      %v1708 = vpack.c.b16 %v1631, %v1630
      %v1709 = vpack.c.b16 %v1633, %v1632
      %v1710 = vpack.c.b16 %v1635, %v1634
      %v1711 = vpack.c.b16 %v1637, %v1636
      %v1712 = vpack.c.b16 %v1639, %v1638
      %v1713 = vpack.c.b16 %v1641, %v1640
      %1786 = vmatprep.subr.bf16.mxu0 0
      %1787 = vmatpush1.bf16.msra.mxu0 %v1642
      %1788 = vmatprep.subr.bf16.mxu0 0
      %1789 = vmatpush1.bf16.msra.mxu0 %v1643
      %1790 = vmatprep.subr.bf16.mxu0 0
      %1791 = vmatpush1.bf16.msra.mxu0 %v1644
      %1792 = vmatprep.subr.bf16.mxu0 0
      %1793 = vmatpush1.bf16.msra.mxu0 %v1645
      %1794 = vmatprep.subr.bf16.mxu0 0
      %1795 = vmatpush1.bf16.msra.mxu0 %v1646
      %1796 = vmatprep.subr.bf16.mxu0 0
      %1797 = vmatpush1.bf16.msra.mxu0 %v1647
      %1798 = vmatprep.subr.bf16.mxu0 0
      %1799 = vmatpush1.bf16.msra.mxu0 %v1648
      %1800 = vmatprep.subr.bf16.mxu0 0
      %1801 = vmatpush1.bf16.msra.mxu0 %v1649
      %1802 = vmatprep.subr.bf16.mxu0 0
      %1803 = vmatpush1.bf16.msra.mxu0 %v1650
      %1804 = vmatprep.subr.bf16.mxu0 0
      %1805 = vmatpush1.bf16.msra.mxu0 %v1651
      %1806 = vmatprep.subr.bf16.mxu0 0
      %1807 = vmatpush1.bf16.msra.mxu0 %v1652
      %1808 = vmatprep.subr.bf16.mxu0 0
      %1809 = vmatpush1.bf16.msra.mxu0 %v1653
      %1810 = vmatprep.subr.bf16.mxu0 0
      %1811 = vmatpush1.bf16.msra.mxu0 %v1654
      %1812 = vmatprep.subr.bf16.mxu0 0
      %1813 = vmatpush1.bf16.msra.mxu0 %v1655
      %1814 = vmatprep.subr.bf16.mxu0 0
      %1815 = vmatpush1.bf16.msra.mxu0 %v1656
      %1816 = vmatprep.subr.bf16.mxu0 0
      %1817 = vmatpush1.bf16.msra.mxu0 %v1657
      %1818 = vmatprep.mubr.bf16.mxu0 %v890
      %1819 = vmatmul.mubr.bf16.gmra.mrb[0].mxu0 %v844
      %v1820 = vpop.f32.mrb[0].mxu0
      %v1821 = vadd.f32 %v1352, %v1820
      %v1822 = vpop.f32.mrb[0].mxu0
      %v1823 = vpop.f32.mrb[0].mxu0
      %v1824 = vadd.f32 %v1352, %v1823
      %v1825 = vpop.f32.mrb[0].mxu0
      %1826 = vmatprep.mubr.bf16.mxu0 %v902
      %1827 = vmatmul.mubr.bf16.gmra.mrb[0].mxu0 %v845
      %v1828 = vpop.f32.mrb[0].mxu0
      %v1829 = vadd.f32 %v1352, %v1828
      %v1830 = vpop.f32.mrb[0].mxu0
      %v1831 = vpop.f32.mrb[0].mxu0
      %v1832 = vadd.f32 %v1352, %v1831
      %v1833 = vpop.f32.mrb[0].mxu0
      %1834 = vmatprep.mubr.bf16.mxu0 %v914
      %1835 = vmatmul.mubr.bf16.gmra.mrb[0].mxu0 %v846
      %v1836 = vpop.f32.mrb[0].mxu0
      %v1837 = vadd.f32 %v1352, %v1836
      %v1838 = vpop.f32.mrb[0].mxu0
      %v1839 = vpop.f32.mrb[0].mxu0
      %v1840 = vadd.f32 %v1352, %v1839
      %v1841 = vpop.f32.mrb[0].mxu0
      %1842 = vmatprep.mubr.bf16.mxu0 %v926
      %1843 = vmatmul.mubr.bf16.gmra.mrb[0].mxu0 %v847
      %v1844 = vpop.f32.mrb[0].mxu0
      %v1845 = vadd.f32 %v1352, %v1844
      %v1846 = vpop.f32.mrb[0].mxu0
      %v1847 = vpop.f32.mrb[0].mxu0
      %v1848 = vadd.f32 %v1352, %v1847
      %v1849 = vpop.f32.mrb[0].mxu0
      %1850 = vmatprep.mubr.bf16.mxu0 %v938
      %1851 = vmatmul.mubr.bf16.gmra.mrb[0].mxu0 %v848
      %v1852 = vpop.f32.mrb[0].mxu0
      %v1853 = vadd.f32 %v1352, %v1852
      %v1854 = vpop.f32.mrb[0].mxu0
      %v1855 = vpop.f32.mrb[0].mxu0
      %v1856 = vadd.f32 %v1352, %v1855
      %v1857 = vpop.f32.mrb[0].mxu0
      %1858 = vmatprep.mubr.bf16.mxu0 %v950
      %1859 = vmatmul.mubr.bf16.gmra.mrb[0].mxu0 %v849
      %v1860 = vpop.f32.mrb[0].mxu0
      %v1861 = vadd.f32 %v1352, %v1860
      %v1862 = vpop.f32.mrb[0].mxu0
      %v1863 = vpop.f32.mrb[0].mxu0
      %v1864 = vadd.f32 %v1352, %v1863
      %v1865 = vpop.f32.mrb[0].mxu0
      %1866 = vmatprep.mubr.bf16.mxu0 %v962
      %1867 = vmatmul.mubr.bf16.gmra.mrb[0].mxu0 %v850
      %v1868 = vpop.f32.mrb[0].mxu0
      %v1869 = vadd.f32 %v1352, %v1868
      %v1870 = vpop.f32.mrb[0].mxu0
      %v1871 = vpop.f32.mrb[0].mxu0
      %v1872 = vadd.f32 %v1352, %v1871
      %v1873 = vpop.f32.mrb[0].mxu0
      %1874 = vmatprep.mubr.bf16.mxu0 %v974
      %1875 = vmatmul.mubr.bf16.gmra.mrb[0].mxu0 %v851
      %v1876 = vpop.f32.mrb[0].mxu0
      %v1877 = vadd.f32 %v1352, %v1876
      %v1878 = vpop.f32.mrb[0].mxu0
      %v1879 = vpop.f32.mrb[0].mxu0
      %v1880 = vadd.f32 %v1352, %v1879
      %v1881 = vpop.f32.mrb[0].mxu0
      %1882 = vmatprep.mubr.bf16.mxu0 %v986
      %1883 = vmatmul.mubr.bf16.gmra.mrb[0].mxu0 %v852
      %v1884 = vpop.f32.mrb[0].mxu0
      %v1885 = vadd.f32 %v1352, %v1884
      %v1886 = vpop.f32.mrb[0].mxu0
      %v1887 = vpop.f32.mrb[0].mxu0
      %v1888 = vadd.f32 %v1352, %v1887
      %v1889 = vpop.f32.mrb[0].mxu0
      %1890 = vmatprep.mubr.bf16.mxu0 %v998
      %1891 = vmatmul.mubr.bf16.gmra.mrb[0].mxu0 %v853
      %v1892 = vpop.f32.mrb[0].mxu0
      %v1893 = vadd.f32 %v1352, %v1892
      %v1894 = vpop.f32.mrb[0].mxu0
      %v1895 = vpop.f32.mrb[0].mxu0
      %v1896 = vadd.f32 %v1352, %v1895
      %v1897 = vpop.f32.mrb[0].mxu0
      %1898 = vmatprep.mubr.bf16.mxu0 %v1010
      %1899 = vmatmul.mubr.bf16.gmra.mrb[0].mxu0 %v854
      %v1900 = vpop.f32.mrb[0].mxu0
      %v1901 = vadd.f32 %v1352, %v1900
      %v1902 = vpop.f32.mrb[0].mxu0
      %v1903 = vpop.f32.mrb[0].mxu0
      %v1904 = vadd.f32 %v1352, %v1903
      %v1905 = vpop.f32.mrb[0].mxu0
      %1906 = vmatprep.mubr.bf16.mxu0 %v1022
      %1907 = vmatmul.mubr.bf16.gmra.mrb[0].mxu0 %v855
      %v1908 = vpop.f32.mrb[0].mxu0
      %v1909 = vadd.f32 %v1352, %v1908
      %v1910 = vpop.f32.mrb[0].mxu0
      %v1911 = vpop.f32.mrb[0].mxu0
      %v1912 = vadd.f32 %v1352, %v1911
      %v1913 = vpop.f32.mrb[0].mxu0
      %1914 = vmatprep.mubr.bf16.mxu0 %v1034
      %1915 = vmatmul.mubr.bf16.gmra.mrb[0].mxu0 %v856
      %v1916 = vpop.f32.mrb[0].mxu0
      %v1917 = vadd.f32 %v1352, %v1916
      %v1918 = vpop.f32.mrb[0].mxu0
      %v1919 = vpop.f32.mrb[0].mxu0
      %v1920 = vadd.f32 %v1352, %v1919
      %v1921 = vpop.f32.mrb[0].mxu0
      %1922 = vmatprep.mubr.bf16.mxu0 %v1046
      %1923 = vmatmul.mubr.bf16.gmra.mrb[0].mxu0 %v857
      %v1924 = vpop.f32.mrb[0].mxu0
      %v1925 = vadd.f32 %v1352, %v1924
      %v1926 = vpop.f32.mrb[0].mxu0
      %v1927 = vpop.f32.mrb[0].mxu0
      %v1928 = vadd.f32 %v1352, %v1927
      %v1929 = vpop.f32.mrb[0].mxu0
      %1930 = vmatprep.mubr.bf16.mxu0 %v1058
      %1931 = vmatmul.mubr.bf16.gmra.mrb[0].mxu0 %v858
      %v1932 = vpop.f32.mrb[0].mxu0
      %v1933 = vadd.f32 %v1352, %v1932
      %v1934 = vpop.f32.mrb[0].mxu0
      %v1935 = vpop.f32.mrb[0].mxu0
      %v1936 = vadd.f32 %v1352, %v1935
      %v1937 = vpop.f32.mrb[0].mxu0
      %1938 = vmatprep.mubr.bf16.mxu0 %v1070
      %1939 = vmatmul.mubr.bf16.gmra.mrb[0].mxu0 %v859
      %v1940 = vpop.f32.mrb[0].mxu0
      %v1941 = vadd.f32 %v1352, %v1940
      %v1942 = vpop.f32.mrb[0].mxu0
      %v1943 = vpop.f32.mrb[0].mxu0
      %v1944 = vadd.f32 %v1352, %v1943
      %v1945 = vpop.f32.mrb[0].mxu0
      %1946 = vdwg.mxu0
      %1947 = vmatprep.subr.bf16.mxu0 0
      %1948 = vmatpush1.bf16.msra.mxu0 %v1658
      %1949 = vmatprep.subr.bf16.mxu0 0
      %1950 = vmatpush1.bf16.msra.mxu0 %v1659
      %1951 = vmatprep.subr.bf16.mxu0 0
      %1952 = vmatpush1.bf16.msra.mxu0 %v1660
      %1953 = vmatprep.subr.bf16.mxu0 0
      %1954 = vmatpush1.bf16.msra.mxu0 %v1661
      %1955 = vmatprep.subr.bf16.mxu0 0
      %1956 = vmatpush1.bf16.msra.mxu0 %v1662
      %1957 = vmatprep.subr.bf16.mxu0 0
      %1958 = vmatpush1.bf16.msra.mxu0 %v1663
      %1959 = vmatprep.subr.bf16.mxu0 0
      %1960 = vmatpush1.bf16.msra.mxu0 %v1664
      %1961 = vmatprep.subr.bf16.mxu0 0
      %1962 = vmatpush1.bf16.msra.mxu0 %v1665
      %1963 = vmatprep.subr.bf16.mxu0 0
      %1964 = vmatpush1.bf16.msra.mxu0 %v1666
      %1965 = vmatprep.subr.bf16.mxu0 0
      %1966 = vmatpush1.bf16.msra.mxu0 %v1667
      %1967 = vmatprep.subr.bf16.mxu0 0
      %1968 = vmatpush1.bf16.msra.mxu0 %v1668
      %1969 = vmatprep.subr.bf16.mxu0 0
      %1970 = vmatpush1.bf16.msra.mxu0 %v1669
      %1971 = vmatprep.subr.bf16.mxu0 0
      %1972 = vmatpush1.bf16.msra.mxu0 %v1670
      %1973 = vmatprep.subr.bf16.mxu0 0
      %1974 = vmatpush1.bf16.msra.mxu0 %v1671
      %1975 = vmatprep.subr.bf16.mxu0 0
      %1976 = vmatpush1.bf16.msra.mxu0 %v1672
      %1977 = vmatprep.subr.bf16.mxu0 0
      %1978 = vmatpush1.bf16.msra.mxu0 %v1673
      %1979 = vmatprep.mubr.bf16.mxu0 %v845
      %1980 = vmatmul.mubr.bf16.gmra.mrb[0].mxu0 %v1137
      %v1981 = vpop.f32.mrb[0].mxu0
      %v1982 = vadd.f32 %v1821, %v1981
      %v1983 = vpop.f32.mrb[0].mxu0
      %v1984 = vpop.f32.mrb[0].mxu0
      %v1985 = vadd.f32 %v1824, %v1984
      %v1986 = vpop.f32.mrb[0].mxu0
      %1987 = vmatprep.mubr.bf16.mxu0 %v846
      %1988 = vmatmul.mubr.bf16.gmra.mrb[0].mxu0 %v1140
      %v1989 = vpop.f32.mrb[0].mxu0
      %v1990 = vadd.f32 %v1829, %v1989
      %v1991 = vpop.f32.mrb[0].mxu0
      %v1992 = vpop.f32.mrb[0].mxu0
      %v1993 = vadd.f32 %v1832, %v1992
      %v1994 = vpop.f32.mrb[0].mxu0
      %1995 = vmatprep.mubr.bf16.mxu0 %v847
      %1996 = vmatmul.mubr.bf16.gmra.mrb[0].mxu0 %v1143
      %v1997 = vpop.f32.mrb[0].mxu0
      %v1998 = vadd.f32 %v1837, %v1997
      %v1999 = vpop.f32.mrb[0].mxu0
      %v2000 = vpop.f32.mrb[0].mxu0
      %v2001 = vadd.f32 %v1840, %v2000
      %v2002 = vpop.f32.mrb[0].mxu0
      %2003 = vmatprep.mubr.bf16.mxu0 %v848
      %2004 = vmatmul.mubr.bf16.gmra.mrb[0].mxu0 %v1146
      %v2005 = vpop.f32.mrb[0].mxu0
      %v2006 = vadd.f32 %v1845, %v2005
      %v2007 = vpop.f32.mrb[0].mxu0
      %v2008 = vpop.f32.mrb[0].mxu0
      %v2009 = vadd.f32 %v1848, %v2008
      %v2010 = vpop.f32.mrb[0].mxu0
      %2011 = vmatprep.mubr.bf16.mxu0 %v849
      %2012 = vmatmul.mubr.bf16.gmra.mrb[0].mxu0 %v1149
      %v2013 = vpop.f32.mrb[0].mxu0
      %v2014 = vadd.f32 %v1853, %v2013
      %v2015 = vpop.f32.mrb[0].mxu0
      %v2016 = vpop.f32.mrb[0].mxu0
      %v2017 = vadd.f32 %v1856, %v2016
      %v2018 = vpop.f32.mrb[0].mxu0
      %2019 = vmatprep.mubr.bf16.mxu0 %v850
      %2020 = vmatmul.mubr.bf16.gmra.mrb[0].mxu0 %v1152
      %v2021 = vpop.f32.mrb[0].mxu0
      %v2022 = vadd.f32 %v1861, %v2021
      %v2023 = vpop.f32.mrb[0].mxu0
      %v2024 = vpop.f32.mrb[0].mxu0
      %v2025 = vadd.f32 %v1864, %v2024
      %v2026 = vpop.f32.mrb[0].mxu0
      %2027 = vmatprep.mubr.bf16.mxu0 %v851
      %2028 = vmatmul.mubr.bf16.gmra.mrb[0].mxu0 %v1155
      %v2029 = vpop.f32.mrb[0].mxu0
      %v2030 = vadd.f32 %v1869, %v2029
      %v2031 = vpop.f32.mrb[0].mxu0
      %v2032 = vpop.f32.mrb[0].mxu0
      %v2033 = vadd.f32 %v1872, %v2032
      %v2034 = vpop.f32.mrb[0].mxu0
      %2035 = vmatprep.mubr.bf16.mxu0 %v852
      %2036 = vmatmul.mubr.bf16.gmra.mrb[0].mxu0 %v1158
      %v2037 = vpop.f32.mrb[0].mxu0
      %v2038 = vadd.f32 %v1877, %v2037
      %v2039 = vpop.f32.mrb[0].mxu0
      %v2040 = vpop.f32.mrb[0].mxu0
      %v2041 = vadd.f32 %v1880, %v2040
      %v2042 = vpop.f32.mrb[0].mxu0
      %2043 = vmatprep.mubr.bf16.mxu0 %v853
      %2044 = vmatmul.mubr.bf16.gmra.mrb[0].mxu0 %v1161
      %v2045 = vpop.f32.mrb[0].mxu0
      %v2046 = vadd.f32 %v1885, %v2045
      %v2047 = vpop.f32.mrb[0].mxu0
      %v2048 = vpop.f32.mrb[0].mxu0
      %v2049 = vadd.f32 %v1888, %v2048
      %v2050 = vpop.f32.mrb[0].mxu0
      %2051 = vmatprep.mubr.bf16.mxu0 %v854
      %2052 = vmatmul.mubr.bf16.gmra.mrb[0].mxu0 %v1164
      %v2053 = vpop.f32.mrb[0].mxu0
      %v2054 = vadd.f32 %v1893, %v2053
      %v2055 = vpop.f32.mrb[0].mxu0
      %v2056 = vpop.f32.mrb[0].mxu0
      %v2057 = vadd.f32 %v1896, %v2056
      %v2058 = vpop.f32.mrb[0].mxu0
      %2059 = vmatprep.mubr.bf16.mxu0 %v855
      %2060 = vmatmul.mubr.bf16.gmra.mrb[0].mxu0 %v1167
      %v2061 = vpop.f32.mrb[0].mxu0
      %v2062 = vadd.f32 %v1901, %v2061
      %v2063 = vpop.f32.mrb[0].mxu0
      %v2064 = vpop.f32.mrb[0].mxu0
      %v2065 = vadd.f32 %v1904, %v2064
      %v2066 = vpop.f32.mrb[0].mxu0
      %2067 = vmatprep.mubr.bf16.mxu0 %v856
      %2068 = vmatmul.mubr.bf16.gmra.mrb[0].mxu0 %v1170
      %v2069 = vpop.f32.mrb[0].mxu0
      %v2070 = vadd.f32 %v1909, %v2069
      %v2071 = vpop.f32.mrb[0].mxu0
      %v2072 = vpop.f32.mrb[0].mxu0
      %v2073 = vadd.f32 %v1912, %v2072
      %v2074 = vpop.f32.mrb[0].mxu0
      %2075 = vmatprep.mubr.bf16.mxu0 %v857
      %2076 = vmatmul.mubr.bf16.gmra.mrb[0].mxu0 %v1173
      %v2077 = vpop.f32.mrb[0].mxu0
      %v2078 = vadd.f32 %v1917, %v2077
      %v2079 = vpop.f32.mrb[0].mxu0
      %v2080 = vpop.f32.mrb[0].mxu0
      %v2081 = vadd.f32 %v1920, %v2080
      %v2082 = vpop.f32.mrb[0].mxu0
      %2083 = vmatprep.mubr.bf16.mxu0 %v858
      %2084 = vmatmul.mubr.bf16.gmra.mrb[0].mxu0 %v1176
      %v2085 = vpop.f32.mrb[0].mxu0
      %v2086 = vadd.f32 %v1925, %v2085
      %v2087 = vpop.f32.mrb[0].mxu0
      %v2088 = vpop.f32.mrb[0].mxu0
      %v2089 = vadd.f32 %v1928, %v2088
      %v2090 = vpop.f32.mrb[0].mxu0
      %2091 = vmatprep.mubr.bf16.mxu0 %v859
      %2092 = vmatmul.mubr.bf16.gmra.mrb[0].mxu0 %v1179
      %v2093 = vpop.f32.mrb[0].mxu0
      %v2094 = vadd.f32 %v1933, %v2093
      %v2095 = vpop.f32.mrb[0].mxu0
      %v2096 = vpop.f32.mrb[0].mxu0
      %v2097 = vadd.f32 %v1936, %v2096
      %v2098 = vpop.f32.mrb[0].mxu0
      %2099 = vmatprep.mubr.bf16.mxu0 %v860
      %2100 = vmatmul.mubr.bf16.gmra.mrb[0].mxu0 %v1182
      %v2101 = vpop.f32.mrb[0].mxu0
      %v2102 = vadd.f32 %v1941, %v2101
      %v2103 = vpop.f32.mrb[0].mxu0
      %v2104 = vpop.f32.mrb[0].mxu0
      %v2105 = vadd.f32 %v1944, %v2104
      %v2106 = vpop.f32.mrb[0].mxu0
      %2107 = vdwg.mxu0
      %2108 = vmatprep.subr.bf16.mxu0 0
      %2109 = vmatpush1.bf16.msra.mxu0 %v1674
      %2110 = vmatprep.subr.bf16.mxu0 0
      %2111 = vmatpush1.bf16.msra.mxu0 %v1675
      %2112 = vmatprep.subr.bf16.mxu0 0
      %2113 = vmatpush1.bf16.msra.mxu0 %v1676
      %2114 = vmatprep.subr.bf16.mxu0 0
      %2115 = vmatpush1.bf16.msra.mxu0 %v1677
      %2116 = vmatprep.subr.bf16.mxu0 0
      %2117 = vmatpush1.bf16.msra.mxu0 %v1678
      %2118 = vmatprep.subr.bf16.mxu0 0
      %2119 = vmatpush1.bf16.msra.mxu0 %v1679
      %2120 = vmatprep.subr.bf16.mxu0 0
      %2121 = vmatpush1.bf16.msra.mxu0 %v1680
      %2122 = vmatprep.subr.bf16.mxu0 0
      %2123 = vmatpush1.bf16.msra.mxu0 %v1681
      %2124 = vmatprep.subr.bf16.mxu0 0
      %2125 = vmatpush1.bf16.msra.mxu0 %v1682
      %2126 = vmatprep.subr.bf16.mxu0 0
      %2127 = vmatpush1.bf16.msra.mxu0 %v1683
      %2128 = vmatprep.subr.bf16.mxu0 0
      %2129 = vmatpush1.bf16.msra.mxu0 %v1684
      %2130 = vmatprep.subr.bf16.mxu0 0
      %2131 = vmatpush1.bf16.msra.mxu0 %v1685
      %2132 = vmatprep.subr.bf16.mxu0 0
      %2133 = vmatpush1.bf16.msra.mxu0 %v1686
      %2134 = vmatprep.subr.bf16.mxu0 0
      %2135 = vmatpush1.bf16.msra.mxu0 %v1687
      %2136 = vmatprep.subr.bf16.mxu0 0
      %2137 = vmatpush1.bf16.msra.mxu0 %v1688
      %2138 = vmatprep.subr.bf16.mxu0 0
      %2139 = vmatpush1.bf16.msra.mxu0 %v1689
      %2140 = vmatprep.mubr.bf16.mxu0 %v1140
      %2141 = vmatmul.mubr.bf16.gmra.mrb[0].mxu0 %v902
      %v2142 = vpop.f32.mrb[0].mxu0
      %v2143 = vadd.f32 %v1982, %v2142
      %v2144 = vpop.f32.mrb[0].mxu0
      %v2145 = vpop.f32.mrb[0].mxu0
      %v2146 = vadd.f32 %v1985, %v2145
      %v2147 = vpop.f32.mrb[0].mxu0
      %2148 = vmatprep.mubr.bf16.mxu0 %v1143
      %2149 = vmatmul.mubr.bf16.gmra.mrb[0].mxu0 %v914
      %v2150 = vpop.f32.mrb[0].mxu0
      %v2151 = vadd.f32 %v1990, %v2150
      %v2152 = vpop.f32.mrb[0].mxu0
      %v2153 = vpop.f32.mrb[0].mxu0
      %v2154 = vadd.f32 %v1993, %v2153
      %v2155 = vpop.f32.mrb[0].mxu0
      %2156 = vmatprep.mubr.bf16.mxu0 %v1146
      %2157 = vmatmul.mubr.bf16.gmra.mrb[0].mxu0 %v926
      %v2158 = vpop.f32.mrb[0].mxu0
      %v2159 = vadd.f32 %v1998, %v2158
      %v2160 = vpop.f32.mrb[0].mxu0
      %v2161 = vpop.f32.mrb[0].mxu0
      %v2162 = vadd.f32 %v2001, %v2161
      %v2163 = vpop.f32.mrb[0].mxu0
      %2164 = vmatprep.mubr.bf16.mxu0 %v1149
      %2165 = vmatmul.mubr.bf16.gmra.mrb[0].mxu0 %v938
      %v2166 = vpop.f32.mrb[0].mxu0
      %v2167 = vadd.f32 %v2006, %v2166
      %v2168 = vpop.f32.mrb[0].mxu0
      %v2169 = vpop.f32.mrb[0].mxu0
      %v2170 = vadd.f32 %v2009, %v2169
      %v2171 = vpop.f32.mrb[0].mxu0
      %2172 = vmatprep.mubr.bf16.mxu0 %v1152
      %2173 = vmatmul.mubr.bf16.gmra.mrb[0].mxu0 %v950
      %v2174 = vpop.f32.mrb[0].mxu0
      %v2175 = vadd.f32 %v2014, %v2174
      %v2176 = vpop.f32.mrb[0].mxu0
      %v2177 = vpop.f32.mrb[0].mxu0
      %v2178 = vadd.f32 %v2017, %v2177
      %v2179 = vpop.f32.mrb[0].mxu0
      %2180 = vmatprep.mubr.bf16.mxu0 %v1155
      %2181 = vmatmul.mubr.bf16.gmra.mrb[0].mxu0 %v962
      %v2182 = vpop.f32.mrb[0].mxu0
      %v2183 = vadd.f32 %v2022, %v2182
      %v2184 = vpop.f32.mrb[0].mxu0
      %v2185 = vpop.f32.mrb[0].mxu0
      %v2186 = vadd.f32 %v2025, %v2185
      %v2187 = vpop.f32.mrb[0].mxu0
      %2188 = vmatprep.mubr.bf16.mxu0 %v1158
      %2189 = vmatmul.mubr.bf16.gmra.mrb[0].mxu0 %v974
      %v2190 = vpop.f32.mrb[0].mxu0
      %v2191 = vadd.f32 %v2030, %v2190
      %v2192 = vpop.f32.mrb[0].mxu0
      %v2193 = vpop.f32.mrb[0].mxu0
      %v2194 = vadd.f32 %v2033, %v2193
      %v2195 = vpop.f32.mrb[0].mxu0
      %2196 = vmatprep.mubr.bf16.mxu0 %v1161
      %2197 = vmatmul.mubr.bf16.gmra.mrb[0].mxu0 %v986
      %v2198 = vpop.f32.mrb[0].mxu0
      %v2199 = vadd.f32 %v2038, %v2198
      %v2200 = vpop.f32.mrb[0].mxu0
      %v2201 = vpop.f32.mrb[0].mxu0
      %v2202 = vadd.f32 %v2041, %v2201
      %v2203 = vpop.f32.mrb[0].mxu0
      %2204 = vmatprep.mubr.bf16.mxu0 %v1164
      %2205 = vmatmul.mubr.bf16.gmra.mrb[0].mxu0 %v998
      %v2206 = vpop.f32.mrb[0].mxu0
      %v2207 = vadd.f32 %v2046, %v2206
      %v2208 = vpop.f32.mrb[0].mxu0
      %v2209 = vpop.f32.mrb[0].mxu0
      %v2210 = vadd.f32 %v2049, %v2209
      %v2211 = vpop.f32.mrb[0].mxu0
      %2212 = vmatprep.mubr.bf16.mxu0 %v1167
      %2213 = vmatmul.mubr.bf16.gmra.mrb[0].mxu0 %v1010
      %v2214 = vpop.f32.mrb[0].mxu0
      %v2215 = vadd.f32 %v2054, %v2214
      %v2216 = vpop.f32.mrb[0].mxu0
      %v2217 = vpop.f32.mrb[0].mxu0
      %v2218 = vadd.f32 %v2057, %v2217
      %v2219 = vpop.f32.mrb[0].mxu0
      %2220 = vmatprep.mubr.bf16.mxu0 %v1170
      %2221 = vmatmul.mubr.bf16.gmra.mrb[0].mxu0 %v1022
      %v2222 = vpop.f32.mrb[0].mxu0
      %v2223 = vadd.f32 %v2062, %v2222
      %v2224 = vpop.f32.mrb[0].mxu0
      %v2225 = vpop.f32.mrb[0].mxu0
      %v2226 = vadd.f32 %v2065, %v2225
      %v2227 = vpop.f32.mrb[0].mxu0
      %2228 = vmatprep.mubr.bf16.mxu0 %v1173
      %2229 = vmatmul.mubr.bf16.gmra.mrb[0].mxu0 %v1034
      %v2230 = vpop.f32.mrb[0].mxu0
      %v2231 = vadd.f32 %v2070, %v2230
      %v2232 = vpop.f32.mrb[0].mxu0
      %v2233 = vpop.f32.mrb[0].mxu0
      %v2234 = vadd.f32 %v2073, %v2233
      %v2235 = vpop.f32.mrb[0].mxu0
      %2236 = vmatprep.mubr.bf16.mxu0 %v1176
      %2237 = vmatmul.mubr.bf16.gmra.mrb[0].mxu0 %v1046
      %v2238 = vpop.f32.mrb[0].mxu0
      %v2239 = vadd.f32 %v2078, %v2238
      %v2240 = vpop.f32.mrb[0].mxu0
      %v2241 = vpop.f32.mrb[0].mxu0
      %v2242 = vadd.f32 %v2081, %v2241
      %v2243 = vpop.f32.mrb[0].mxu0
      %2244 = vmatprep.mubr.bf16.mxu0 %v1179
      %2245 = vmatmul.mubr.bf16.gmra.mrb[0].mxu0 %v1058
      %v2246 = vpop.f32.mrb[0].mxu0
      %v2247 = vadd.f32 %v2086, %v2246
      %v2248 = vpop.f32.mrb[0].mxu0
      %v2249 = vpop.f32.mrb[0].mxu0
      %v2250 = vadd.f32 %v2089, %v2249
      %v2251 = vpop.f32.mrb[0].mxu0
      %2252 = vmatprep.mubr.bf16.mxu0 %v1182
      %2253 = vmatmul.mubr.bf16.gmra.mrb[0].mxu0 %v1070
      %v2254 = vpop.f32.mrb[0].mxu0
      %v2255 = vadd.f32 %v2094, %v2254
      %v2256 = vpop.f32.mrb[0].mxu0
      %v2257 = vpop.f32.mrb[0].mxu0
      %v2258 = vadd.f32 %v2097, %v2257
      %v2259 = vpop.f32.mrb[0].mxu0
      %2260 = vmatprep.mubr.bf16.mxu0 %v1185
      %2261 = vmatmul.mubr.bf16.gmra.mrb[0].mxu0 %v1082
      %v2262 = vpop.f32.mrb[0].mxu0
      %v2263 = vadd.f32 %v2102, %v2262
      %v2264 = vpop.f32.mrb[0].mxu0
      %v2265 = vpop.f32.mrb[0].mxu0
      %v2266 = vadd.f32 %v2105, %v2265
      %v2267 = vpop.f32.mrb[0].mxu0
      %2268 = vdwg.mxu0
      %2269 = vmatprep.subr.bf16.mxu0 0
      %2270 = vmatpush1.bf16.msra.mxu0 %v1690
      %2271 = vmatprep.subr.bf16.mxu0 0
      %2272 = vmatpush1.bf16.msra.mxu0 %v1691
      %2273 = vmatprep.subr.bf16.mxu0 0
      %2274 = vmatpush1.bf16.msra.mxu0 %v1692
      %2275 = vmatprep.subr.bf16.mxu0 0
      %2276 = vmatpush1.bf16.msra.mxu0 %v1693
      %2277 = vmatprep.subr.bf16.mxu0 0
      %2278 = vmatpush1.bf16.msra.mxu0 %v1694
      %2279 = vmatprep.subr.bf16.mxu0 0
      %2280 = vmatpush1.bf16.msra.mxu0 %v1695
      %2281 = vmatprep.subr.bf16.mxu0 0
      %2282 = vmatpush1.bf16.msra.mxu0 %v1696
      %2283 = vmatprep.subr.bf16.mxu0 0
      %2284 = vmatpush1.bf16.msra.mxu0 %v1697
      %2285 = vmatprep.subr.bf16.mxu0 0
      %2286 = vmatpush1.bf16.msra.mxu0 %v1698
      %2287 = vmatprep.subr.bf16.mxu0 0
      %2288 = vmatpush1.bf16.msra.mxu0 %v1699
      %2289 = vmatprep.subr.bf16.mxu0 0
      %2290 = vmatpush1.bf16.msra.mxu0 %v1700
      %2291 = vmatprep.subr.bf16.mxu0 0
      %2292 = vmatpush1.bf16.msra.mxu0 %v1701
      %2293 = vmatprep.subr.bf16.mxu0 0
      %2294 = vmatpush1.bf16.msra.mxu0 %v1702
      %2295 = vmatprep.subr.bf16.mxu0 0
      %2296 = vmatpush1.bf16.msra.mxu0 %v1703
      %2297 = vmatprep.subr.bf16.mxu0 0
      %2298 = vmatpush1.bf16.msra.mxu0 %v1704
      %2299 = vmatprep.subr.bf16.mxu0 0
      %2300 = vmatpush1.bf16.msra.mxu0 %v1705
      %2301 = vmatprep.mubr.bf16.mxu0 %v914
      %2302 = vmatmul.mubr.bf16.gmra.mrb[0].mxu0 %v846
      %v2303 = vpop.f32.mrb[0].mxu0
      %v2304 = vadd.f32 %v2143, %v2303
      %v2305 = vpop.f32.mrb[0].mxu0
      %v2306 = vpop.f32.mrb[0].mxu0
      %v2307 = vadd.f32 %v2146, %v2306
      %v2308 = vpop.f32.mrb[0].mxu0
      %2309 = vmatprep.mubr.bf16.mxu0 %v926
      %2310 = vmatmul.mubr.bf16.gmra.mrb[0].mxu0 %v847
      %v2311 = vpop.f32.mrb[0].mxu0
      %v2312 = vadd.f32 %v2151, %v2311
      %v2313 = vpop.f32.mrb[0].mxu0
      %v2314 = vpop.f32.mrb[0].mxu0
      %v2315 = vadd.f32 %v2154, %v2314
      %v2316 = vpop.f32.mrb[0].mxu0
      %2317 = vmatprep.mubr.bf16.mxu0 %v938
      %2318 = vmatmul.mubr.bf16.gmra.mrb[0].mxu0 %v848
      %v2319 = vpop.f32.mrb[0].mxu0
      %v2320 = vadd.f32 %v2159, %v2319
      %v2321 = vpop.f32.mrb[0].mxu0
      %v2322 = vpop.f32.mrb[0].mxu0
      %v2323 = vadd.f32 %v2162, %v2322
      %v2324 = vpop.f32.mrb[0].mxu0
      %2325 = vmatprep.mubr.bf16.mxu0 %v950
      %2326 = vmatmul.mubr.bf16.gmra.mrb[0].mxu0 %v849
      %v2327 = vpop.f32.mrb[0].mxu0
      %v2328 = vadd.f32 %v2167, %v2327
      %v2329 = vpop.f32.mrb[0].mxu0
      %v2330 = vpop.f32.mrb[0].mxu0
      %v2331 = vadd.f32 %v2170, %v2330
      %v2332 = vpop.f32.mrb[0].mxu0
      %2333 = vmatprep.mubr.bf16.mxu0 %v962
      %2334 = vmatmul.mubr.bf16.gmra.mrb[0].mxu0 %v850
      %v2335 = vpop.f32.mrb[0].mxu0
      %v2336 = vadd.f32 %v2175, %v2335
      %v2337 = vpop.f32.mrb[0].mxu0
      %v2338 = vpop.f32.mrb[0].mxu0
      %v2339 = vadd.f32 %v2178, %v2338
      %v2340 = vpop.f32.mrb[0].mxu0
      %2341 = vmatprep.mubr.bf16.mxu0 %v974
      %2342 = vmatmul.mubr.bf16.gmra.mrb[0].mxu0 %v851
      %v2343 = vpop.f32.mrb[0].mxu0
      %v2344 = vadd.f32 %v2183, %v2343
      %v2345 = vpop.f32.mrb[0].mxu0
      %v2346 = vpop.f32.mrb[0].mxu0
      %v2347 = vadd.f32 %v2186, %v2346
      %v2348 = vpop.f32.mrb[0].mxu0
      %2349 = vmatprep.mubr.bf16.mxu0 %v986
      %2350 = vmatmul.mubr.bf16.gmra.mrb[0].mxu0 %v852
      %v2351 = vpop.f32.mrb[0].mxu0
      %v2352 = vadd.f32 %v2191, %v2351
      %v2353 = vpop.f32.mrb[0].mxu0
      %v2354 = vpop.f32.mrb[0].mxu0
      %v2355 = vadd.f32 %v2194, %v2354
      %v2356 = vpop.f32.mrb[0].mxu0
      %2357 = vmatprep.mubr.bf16.mxu0 %v998
      %2358 = vmatmul.mubr.bf16.gmra.mrb[0].mxu0 %v853
      %v2359 = vpop.f32.mrb[0].mxu0
      %v2360 = vadd.f32 %v2199, %v2359
      %v2361 = vpop.f32.mrb[0].mxu0
      %v2362 = vpop.f32.mrb[0].mxu0
      %v2363 = vadd.f32 %v2202, %v2362
      %v2364 = vpop.f32.mrb[0].mxu0
      %2365 = vmatprep.mubr.bf16.mxu0 %v1010
      %2366 = vmatmul.mubr.bf16.gmra.mrb[0].mxu0 %v854
      %v2367 = vpop.f32.mrb[0].mxu0
      %v2368 = vadd.f32 %v2207, %v2367
      %v2369 = vpop.f32.mrb[0].mxu0
      %v2370 = vpop.f32.mrb[0].mxu0
      %v2371 = vadd.f32 %v2210, %v2370
      %v2372 = vpop.f32.mrb[0].mxu0
      %2373 = vmatprep.mubr.bf16.mxu0 %v1022
      %2374 = vmatmul.mubr.bf16.gmra.mrb[0].mxu0 %v855
      %v2375 = vpop.f32.mrb[0].mxu0
      %v2376 = vadd.f32 %v2215, %v2375
      %v2377 = vpop.f32.mrb[0].mxu0
      %v2378 = vpop.f32.mrb[0].mxu0
      %v2379 = vadd.f32 %v2218, %v2378
      %v2380 = vpop.f32.mrb[0].mxu0
      %2381 = vmatprep.mubr.bf16.mxu0 %v1034
      %2382 = vmatmul.mubr.bf16.gmra.mrb[0].mxu0 %v856
      %v2383 = vpop.f32.mrb[0].mxu0
      %v2384 = vadd.f32 %v2223, %v2383
      %v2385 = vpop.f32.mrb[0].mxu0
      %v2386 = vpop.f32.mrb[0].mxu0
      %v2387 = vadd.f32 %v2226, %v2386
      %v2388 = vpop.f32.mrb[0].mxu0
      %2389 = vmatprep.mubr.bf16.mxu0 %v1046
      %2390 = vmatmul.mubr.bf16.gmra.mrb[0].mxu0 %v857
      %v2391 = vpop.f32.mrb[0].mxu0
      %v2392 = vadd.f32 %v2231, %v2391
      %v2393 = vpop.f32.mrb[0].mxu0
      %v2394 = vpop.f32.mrb[0].mxu0
      %v2395 = vadd.f32 %v2234, %v2394
      %v2396 = vpop.f32.mrb[0].mxu0
      %2397 = vmatprep.mubr.bf16.mxu0 %v1058
      %2398 = vmatmul.mubr.bf16.gmra.mrb[0].mxu0 %v858
      %v2399 = vpop.f32.mrb[0].mxu0
      %v2400 = vadd.f32 %v2239, %v2399
      %v2401 = vpop.f32.mrb[0].mxu0
      %v2402 = vpop.f32.mrb[0].mxu0
      %v2403 = vadd.f32 %v2242, %v2402
      %v2404 = vpop.f32.mrb[0].mxu0
      %2405 = vmatprep.mubr.bf16.mxu0 %v1070
      %2406 = vmatmul.mubr.bf16.gmra.mrb[0].mxu0 %v859
      %v2407 = vpop.f32.mrb[0].mxu0
      %v2408 = vadd.f32 %v2247, %v2407
      %v2409 = vpop.f32.mrb[0].mxu0
      %v2410 = vpop.f32.mrb[0].mxu0
      %v2411 = vadd.f32 %v2250, %v2410
      %v2412 = vpop.f32.mrb[0].mxu0
      %2413 = vmatprep.mubr.bf16.mxu0 %v1082
      %2414 = vmatmul.mubr.bf16.gmra.mrb[0].mxu0 %v860
      %v2415 = vpop.f32.mrb[0].mxu0
      %v2416 = vadd.f32 %v2255, %v2415
      %v2417 = vpop.f32.mrb[0].mxu0
      %v2418 = vpop.f32.mrb[0].mxu0
      %v2419 = vadd.f32 %v2258, %v2418
      %v2420 = vpop.f32.mrb[0].mxu0
      %2421 = vmatprep.mubr.bf16.mxu0 %v890
      %2422 = vmatmul.mubr.bf16.gmra.mrb[0].mxu0 %v844
      %v2423 = vpop.f32.mrb[0].mxu0
      %v2424 = vadd.f32 %v2263, %v2423
      %v2425 = vpop.f32.mrb[0].mxu0
      %v2426 = vpop.f32.mrb[0].mxu0
      %v2427 = vadd.f32 %v2266, %v2426
      %v2428 = vpop.f32.mrb[0].mxu0
      %2429 = vdwg.mxu0
      %2430 = vmatprep.subr.bf16.mxu0 0
      %2431 = vmatpush1.bf16.msra.mxu0 %v1706
      %2432 = vmatprep.subr.bf16.mxu0 0
      %2433 = vmatpush1.bf16.msra.mxu0 %v1707
      %2434 = vmatprep.subr.bf16.mxu0 0
      %2435 = vmatpush1.bf16.msra.mxu0 %v1708
      %2436 = vmatprep.subr.bf16.mxu0 0
      %2437 = vmatpush1.bf16.msra.mxu0 %v1709
      %2438 = vmatprep.subr.bf16.mxu0 0
      %2439 = vmatpush1.bf16.msra.mxu0 %v1710
      %2440 = vmatprep.subr.bf16.mxu0 0
      %2441 = vmatpush1.bf16.msra.mxu0 %v1711
      %2442 = vmatprep.subr.bf16.mxu0 0
      %2443 = vmatpush1.bf16.msra.mxu0 %v1712
      %2444 = vmatprep.subr.bf16.mxu0 0
      %2445 = vmatpush1.bf16.msra.mxu0 %v1713
      %2446 = vmatprep.subr.bf16.mxu0 0
      %2447 = vmatpush1.bf16.msra.mxu0 0
      %2448 = vmatprep.subr.bf16.mxu0 0
      %2449 = vmatpush1.bf16.msra.mxu0 0
      %2450 = vmatprep.subr.bf16.mxu0 0
      %2451 = vmatpush1.bf16.msra.mxu0 0
      %2452 = vmatprep.subr.bf16.mxu0 0
      %2453 = vmatpush1.bf16.msra.mxu0 0
      %2454 = vmatprep.subr.bf16.mxu0 0
      %2455 = vmatpush1.bf16.msra.mxu0 0
      %2456 = vmatprep.subr.bf16.mxu0 0
      %2457 = vmatpush1.bf16.msra.mxu0 0
      %2458 = vmatprep.subr.bf16.mxu0 0
      %2459 = vmatpush1.bf16.msra.mxu0 0
      %2460 = vmatprep.subr.bf16.mxu0 0
      %2461 = vmatpush1.bf16.msra.mxu0 0
      %2462 = vmatprep.mubr.bf16.mxu0 0
      %2463 = vmatmul.mubr.bf16.gmra.mrb[0].mxu0 %v1143
      %v2464 = vpop.f32.mrb[0].mxu0
      %v2465 = vadd.f32 %v2304, %v2464
      %v2466 = vpop.f32.mrb[0].mxu0
      %v2467 = vpop.f32.mrb[0].mxu0
      %v2468 = vadd.f32 %v2307, %v2467
      %v2469 = vpop.f32.mrb[0].mxu0
      %2470 = vmatprep.mubr.bf16.mxu0 0
      %2471 = vmatmul.mubr.bf16.gmra.mrb[0].mxu0 %v1146
      %v2472 = vpop.f32.mrb[0].mxu0
      %v2473 = vadd.f32 %v2312, %v2472
      %v2474 = vpop.f32.mrb[0].mxu0
      %v2475 = vpop.f32.mrb[0].mxu0
      %v2476 = vadd.f32 %v2315, %v2475
      %v2477 = vpop.f32.mrb[0].mxu0
      %2478 = vmatprep.mubr.bf16.mxu0 0
      %2479 = vmatmul.mubr.bf16.gmra.mrb[0].mxu0 %v1149
      %v2480 = vpop.f32.mrb[0].mxu0
      %v2481 = vadd.f32 %v2320, %v2480
      %v2482 = vpop.f32.mrb[0].mxu0
      %v2483 = vpop.f32.mrb[0].mxu0
      %v2484 = vadd.f32 %v2323, %v2483
      %v2485 = vpop.f32.mrb[0].mxu0
      %2486 = vmatprep.mubr.bf16.mxu0 0
      %2487 = vmatmul.mubr.bf16.gmra.mrb[0].mxu0 %v1152
      %v2488 = vpop.f32.mrb[0].mxu0
      %v2489 = vadd.f32 %v2328, %v2488
      %v2490 = vpop.f32.mrb[0].mxu0
      %v2491 = vpop.f32.mrb[0].mxu0
      %v2492 = vadd.f32 %v2331, %v2491
      %v2493 = vpop.f32.mrb[0].mxu0
      %2494 = vmatprep.mubr.bf16.mxu0 0
      %2495 = vmatmul.mubr.bf16.gmra.mrb[0].mxu0 %v1155
      %v2496 = vpop.f32.mrb[0].mxu0
      %v2497 = vadd.f32 %v2336, %v2496
      %v2498 = vpop.f32.mrb[0].mxu0
      %v2499 = vpop.f32.mrb[0].mxu0
      %v2500 = vadd.f32 %v2339, %v2499
      %v2501 = vpop.f32.mrb[0].mxu0
      %2502 = vmatprep.mubr.bf16.mxu0 0
      %2503 = vmatmul.mubr.bf16.gmra.mrb[0].mxu0 %v1158
      %v2504 = vpop.f32.mrb[0].mxu0
      %v2505 = vadd.f32 %v2344, %v2504
      %v2506 = vpop.f32.mrb[0].mxu0
      %v2507 = vpop.f32.mrb[0].mxu0
      %v2508 = vadd.f32 %v2347, %v2507
      %v2509 = vpop.f32.mrb[0].mxu0
      %2510 = vmatprep.mubr.bf16.mxu0 0
      %2511 = vmatmul.mubr.bf16.gmra.mrb[0].mxu0 %v1161
      %v2512 = vpop.f32.mrb[0].mxu0
      %v2513 = vadd.f32 %v2352, %v2512
      %v2514 = vpop.f32.mrb[0].mxu0
      %v2515 = vpop.f32.mrb[0].mxu0
      %v2516 = vadd.f32 %v2355, %v2515
      %v2517 = vpop.f32.mrb[0].mxu0
      %2518 = vmatprep.mubr.bf16.mxu0 0
      %2519 = vmatmul.mubr.bf16.gmra.mrb[0].mxu0 %v1164
      %v2520 = vpop.f32.mrb[0].mxu0
      %v2521 = vadd.f32 %v2360, %v2520
      %v2522 = vpop.f32.mrb[0].mxu0
      %v2523 = vpop.f32.mrb[0].mxu0
      %v2524 = vadd.f32 %v2363, %v2523
      %v2525 = vpop.f32.mrb[0].mxu0
      %2526 = vmatprep.mubr.bf16.mxu0 0
      %2527 = vmatmul.mubr.bf16.gmra.mrb[0].mxu0 %v1167
      %v2528 = vpop.f32.mrb[0].mxu0
      %v2529 = vadd.f32 %v2368, %v2528
      %v2530 = vpop.f32.mrb[0].mxu0
      %v2531 = vpop.f32.mrb[0].mxu0
      %v2532 = vadd.f32 %v2371, %v2531
      %v2533 = vpop.f32.mrb[0].mxu0
      %2534 = vmatprep.mubr.bf16.mxu0 0
      %2535 = vmatmul.mubr.bf16.gmra.mrb[0].mxu0 %v1170
      %v2536 = vpop.f32.mrb[0].mxu0
      %v2537 = vadd.f32 %v2376, %v2536
      %v2538 = vpop.f32.mrb[0].mxu0
      %v2539 = vpop.f32.mrb[0].mxu0
      %v2540 = vadd.f32 %v2379, %v2539
      %v2541 = vpop.f32.mrb[0].mxu0
      %2542 = vmatprep.mubr.bf16.mxu0 0
      %2543 = vmatmul.mubr.bf16.gmra.mrb[0].mxu0 %v1173
      %v2544 = vpop.f32.mrb[0].mxu0
      %v2545 = vadd.f32 %v2384, %v2544
      %v2546 = vpop.f32.mrb[0].mxu0
      %v2547 = vpop.f32.mrb[0].mxu0
      %v2548 = vadd.f32 %v2387, %v2547
      %v2549 = vpop.f32.mrb[0].mxu0
      %2550 = vmatprep.mubr.bf16.mxu0 0
      %2551 = vmatmul.mubr.bf16.gmra.mrb[0].mxu0 %v1176
      %v2552 = vpop.f32.mrb[0].mxu0
      %v2553 = vadd.f32 %v2392, %v2552
      %v2554 = vpop.f32.mrb[0].mxu0
      %v2555 = vpop.f32.mrb[0].mxu0
      %v2556 = vadd.f32 %v2395, %v2555
      %v2557 = vpop.f32.mrb[0].mxu0
      %2558 = vmatprep.mubr.bf16.mxu0 0
      %2559 = vmatmul.mubr.bf16.gmra.mrb[0].mxu0 %v1179
      %v2560 = vpop.f32.mrb[0].mxu0
      %v2561 = vadd.f32 %v2400, %v2560
      %v2562 = vpop.f32.mrb[0].mxu0
      %v2563 = vpop.f32.mrb[0].mxu0
      %v2564 = vadd.f32 %v2403, %v2563
      %v2565 = vpop.f32.mrb[0].mxu0
      %2566 = vmatprep.mubr.bf16.mxu0 0
      %2567 = vmatmul.mubr.bf16.gmra.mrb[0].mxu0 %v1182
      %v2568 = vpop.f32.mrb[0].mxu0
      %v2569 = vadd.f32 %v2408, %v2568
      %v2570 = vpop.f32.mrb[0].mxu0
      %v2571 = vpop.f32.mrb[0].mxu0
      %v2572 = vadd.f32 %v2411, %v2571
      %v2573 = vpop.f32.mrb[0].mxu0
      %2574 = vmatprep.mubr.bf16.mxu0 0
      %2575 = vmatmul.mubr.bf16.gmra.mrb[0].mxu0 %v1185
      %v2576 = vpop.f32.mrb[0].mxu0
      %v2577 = vadd.f32 %v2416, %v2576
      %v2578 = vpop.f32.mrb[0].mxu0
      %v2579 = vpop.f32.mrb[0].mxu0
      %v2580 = vadd.f32 %v2419, %v2579
      %v2581 = vpop.f32.mrb[0].mxu0
      %2582 = vmatprep.mubr.bf16.mxu0 0
      %2583 = vmatmul.mubr.bf16.gmra.mrb[0].mxu0 %v1137
      %v2584 = vpop.f32.mrb[0].mxu0
      %v2585 = vadd.f32 %v2424, %v2584
      %v2586 = vpop.f32.mrb[0].mxu0
      %v2587 = vpop.f32.mrb[0].mxu0
      %v2588 = vadd.f32 %v2427, %v2587
      %v2589 = vpop.f32.mrb[0].mxu0
      %2590 = vdwg.mxu0
      %v2591 = vmax.f32 %v2465, 0.0
      %v2592 = vmax.f32 %v2468, 0.0
      %v2593 = vmax.f32 %v2473, 0.0
      %v2594 = vmax.f32 %v2476, 0.0
      %v2595 = vmax.f32 %v2481, 0.0
      %v2596 = vmax.f32 %v2484, 0.0
      %v2597 = vmax.f32 %v2489, 0.0
      %v2598 = vmax.f32 %v2492, 0.0
      %v2599 = vmax.f32 %v2497, 0.0
      %v2600 = vmax.f32 %v2500, 0.0
      %v2601 = vmax.f32 %v2505, 0.0
      %v2602 = vmax.f32 %v2508, 0.0
      %v2603 = vmax.f32 %v2513, 0.0
      %v2604 = vmax.f32 %v2516, 0.0
      %v2605 = vmax.f32 %v2521, 0.0
      %v2606 = vmax.f32 %v2524, 0.0
      %v2607 = vmax.f32 %v2529, 0.0
      %v2608 = vmax.f32 %v2532, 0.0
      %v2609 = vmax.f32 %v2537, 0.0
      %v2610 = vmax.f32 %v2540, 0.0
      %v2611 = vmax.f32 %v2545, 0.0
      %v2612 = vmax.f32 %v2548, 0.0
      %v2613 = vmax.f32 %v2553, 0.0
      %v2614 = vmax.f32 %v2556, 0.0
      %v2615 = vmax.f32 %v2561, 0.0
      %v2616 = vmax.f32 %v2564, 0.0
      %v2617 = vmax.f32 %v2569, 0.0
      %v2618 = vmax.f32 %v2572, 0.0
      %v2619 = vmax.f32 %v2577, 0.0
      %v2620 = vmax.f32 %v2580, 0.0
      %v2621 = vmax.f32 %v2585, 0.0
      %v2622 = vmax.f32 %v2588, 0.0
      %v2623 = vpack.c.bf16 %v2592, %v2591
      %v2624 = vpack.c.bf16 %v2594, %v2593
      %v2625 = vpack.c.bf16 %v2596, %v2595
      %v2626 = vpack.c.bf16 %v2598, %v2597
      %v2627 = vpack.c.bf16 %v2600, %v2599
      %v2628 = vpack.c.bf16 %v2602, %v2601
      %v2629 = vpack.c.bf16 %v2604, %v2603
      %v2630 = vpack.c.bf16 %v2606, %v2605
      %v2631 = vpack.c.bf16 %v2608, %v2607
      %v2632 = vpack.c.bf16 %v2610, %v2609
      %v2633 = vpack.c.bf16 %v2612, %v2611
      %v2634 = vpack.c.bf16 %v2614, %v2613
      %v2635 = vpack.c.bf16 %v2616, %v2615
      %v2636 = vpack.c.bf16 %v2618, %v2617
      %v2637 = vpack.c.bf16 %v2620, %v2619
      %v2638 = vpack.c.bf16 %v2622, %v2621
      %v2639 = vld [vmem:[%s3] sm:$0xf]
      %v2640 = vld [vmem:[%s3 + $0x4] sm:$0xf]
      %v2641 = vld [vmem:[%s3 + $0x8] sm:$0xf]
      %v2642 = vld [vmem:[%s3 + $0xc] sm:$0xf]
      %v2643 = vld [vmem:[%s3 + $0x10] sm:$0xf]
      %v2644 = vld [vmem:[%s3 + $0x14] sm:$0xf]
      %v2645 = vld [vmem:[%s3 + $0x18] sm:$0xf]
      %v2646 = vld [vmem:[%s3 + $0x1c] sm:$0xf]
      %v2647 = vld [vmem:[%s3 + $0x20] sm:$0xf]
      %v2648 = vld [vmem:[%s3 + $0x24] sm:$0xf]
      %v2649 = vld [vmem:[%s3 + $0x28] sm:$0xf]
      %v2650 = vld [vmem:[%s3 + $0x2c] sm:$0xf]
      %v2651 = vld [vmem:[%s3 + $0x30] sm:$0xf]
      %v2652 = vld [vmem:[%s3 + $0x34] sm:$0xf]
      %v2653 = vld [vmem:[%s3 + $0x38] sm:$0xf]
      %v2654 = vld [vmem:[%s3 + $0x3c] sm:$0xf]
      %v2655 = vunpack.c.l.bf16 %v280
      %v2656 = vunpack.c.l.bf16 %v281
      %v2657 = vunpack.c.l.bf16 %v282
      %v2658 = vunpack.c.l.bf16 %v283
      %v2659 = vunpack.c.l.bf16 %v284
      %v2660 = vunpack.c.l.bf16 %v285
      %v2661 = vunpack.c.l.bf16 %v286
      %v2662 = vunpack.c.l.bf16 %v287
      %v2663 = vunpack.c.l.bf16 %v288
      %v2664 = vunpack.c.l.bf16 %v289
      %v2665 = vunpack.c.l.bf16 %v290
      %v2666 = vunpack.c.l.bf16 %v291
      %v2667 = vunpack.c.l.bf16 %v292
      %v2668 = vunpack.c.l.bf16 %v293
      %v2669 = vunpack.c.l.bf16 %v294
      %v2670 = vunpack.c.l.bf16 %v295
      %v2671 = vunpack.c.l.bf16 %v296
      %v2672 = vunpack.c.l.bf16 %v297
      %v2673 = vunpack.c.l.bf16 %v298
      %v2674 = vunpack.c.l.bf16 %v299
      %v2675 = vunpack.c.l.bf16 %v300
      %v2676 = vunpack.c.l.bf16 %v301
      %v2677 = vunpack.c.l.bf16 %v302
      %v2678 = vunpack.c.l.bf16 %v303
      %v2679 = vunpack.c.l.bf16 %v304
      %v2680 = vunpack.c.l.bf16 %v305
      %v2681 = vunpack.c.l.bf16 %v306
      %v2682 = vunpack.c.l.bf16 %v307
      %v2683 = vunpack.c.l.bf16 %v308
      %v2684 = vunpack.c.l.bf16 %v309
      %v2685 = vunpack.c.l.bf16 %v310
      %v2686 = vunpack.c.l.bf16 %v311
      %v2687 = vld [vmem:[%s6] sm:$0x1]
      %v2689 = vlaneseq
      %v2690 = vshrl.u32 %v2689, 7
      %v2691 = vsub.s32 0, %v2690
      %v2692 = vrot.slane %v2687, %v2691
      %v2710 = vunpack.c.l.b16 %v2639
      %v2711 = vunpack.c.l.b16 %v2640
      %v2712 = vunpack.c.l.b16 %v2641
      %v2713 = vunpack.c.l.b16 %v2642
      %v2714 = vunpack.c.l.b16 %v2643
      %v2715 = vunpack.c.l.b16 %v2644
      %v2716 = vunpack.c.l.b16 %v2645
      %v2717 = vunpack.c.l.b16 %v2646
      %v2718 = vunpack.c.l.b16 %v2647
      %v2719 = vunpack.c.l.b16 %v2648
      %v2720 = vunpack.c.l.b16 %v2649
      %v2721 = vunpack.c.l.b16 %v2650
      %v2722 = vunpack.c.l.b16 %v2651
      %v2723 = vunpack.c.l.b16 %v2652
      %v2724 = vunpack.c.l.b16 %v2653
      %v2725 = vunpack.c.l.b16 %v2654
      %v2726 = vpack.c.b16 %v2711, %v2710
      %v2727 = vpack.c.b16 %v2713, %v2712
      %v2728 = vpack.c.b16 %v2715, %v2714
      %v2729 = vpack.c.b16 %v2717, %v2716
      %v2730 = vpack.c.b16 %v2719, %v2718
      %v2731 = vpack.c.b16 %v2721, %v2720
      %v2732 = vpack.c.b16 %v2723, %v2722
      %v2733 = vpack.c.b16 %v2725, %v2724
      %2742 = vmatprep.subr.bf16.mxu0 0
      %2743 = vmatpush1.bf16.msra.mxu0 %v2726
      %2744 = vmatprep.subr.bf16.mxu0 0
      %2745 = vmatpush1.bf16.msra.mxu0 %v2727
      %2746 = vmatprep.subr.bf16.mxu0 0
      %2747 = vmatpush1.bf16.msra.mxu0 %v2728
      %2748 = vmatprep.subr.bf16.mxu0 0
      %2749 = vmatpush1.bf16.msra.mxu0 %v2729
      %2750 = vmatprep.subr.bf16.mxu0 0
      %2751 = vmatpush1.bf16.msra.mxu0 %v2730
      %2752 = vmatprep.subr.bf16.mxu0 0
      %2753 = vmatpush1.bf16.msra.mxu0 %v2731
      %2754 = vmatprep.subr.bf16.mxu0 0
      %2755 = vmatpush1.bf16.msra.mxu0 %v2732
      %2756 = vmatprep.subr.bf16.mxu0 0
      %2757 = vmatpush1.bf16.msra.mxu0 %v2733
      %2758 = vmatprep.subr.bf16.mxu0 0
      %2759 = vmatpush1.bf16.msra.mxu0 0
      %2760 = vmatprep.subr.bf16.mxu0 0
      %2761 = vmatpush1.bf16.msra.mxu0 0
      %2762 = vmatprep.subr.bf16.mxu0 0
      %2763 = vmatpush1.bf16.msra.mxu0 0
      %2764 = vmatprep.subr.bf16.mxu0 0
      %2765 = vmatpush1.bf16.msra.mxu0 0
      %2766 = vmatprep.subr.bf16.mxu0 0
      %2767 = vmatpush1.bf16.msra.mxu0 0
      %2768 = vmatprep.subr.bf16.mxu0 0
      %2769 = vmatpush1.bf16.msra.mxu0 0
      %2770 = vmatprep.subr.bf16.mxu0 0
      %2771 = vmatpush1.bf16.msra.mxu0 0
      %2772 = vmatprep.subr.bf16.mxu0 0
      %2773 = vmatpush1.bf16.msra.mxu0 0
      %2774 = vmatprep.mubr.bf16.mxu0 0
      %2775 = vmatmul.mubr.bf16.gmra.mrb[0].mxu0 %v2623
      %v2776 = vpop.f32.mrb[0].mxu0
      %v2777 = vadd.f32 %v2692, %v2776
      %v2778 = vpop.f32.mrb[0].mxu0
      %v2779 = vpop.f32.mrb[0].mxu0
      %v2780 = vadd.f32 %v2692, %v2779
      %v2781 = vpop.f32.mrb[0].mxu0
      %2782 = vmatprep.mubr.bf16.mxu0 0
      %2783 = vmatmul.mubr.bf16.gmra.mrb[0].mxu0 %v2624
      %v2784 = vpop.f32.mrb[0].mxu0
      %v2785 = vadd.f32 %v2692, %v2784
      %v2786 = vpop.f32.mrb[0].mxu0
      %v2787 = vpop.f32.mrb[0].mxu0
      %v2788 = vadd.f32 %v2692, %v2787
      %v2789 = vpop.f32.mrb[0].mxu0
      %2790 = vmatprep.mubr.bf16.mxu0 0
      %2791 = vmatmul.mubr.bf16.gmra.mrb[0].mxu0 %v2625
      %v2792 = vpop.f32.mrb[0].mxu0
      %v2793 = vadd.f32 %v2692, %v2792
      %v2794 = vpop.f32.mrb[0].mxu0
      %v2795 = vpop.f32.mrb[0].mxu0
      %v2796 = vadd.f32 %v2692, %v2795
      %v2797 = vpop.f32.mrb[0].mxu0
      %2798 = vmatprep.mubr.bf16.mxu0 0
      %2799 = vmatmul.mubr.bf16.gmra.mrb[0].mxu0 %v2626
      %v2800 = vpop.f32.mrb[0].mxu0
      %v2801 = vadd.f32 %v2692, %v2800
      %v2802 = vpop.f32.mrb[0].mxu0
      %v2803 = vpop.f32.mrb[0].mxu0
      %v2804 = vadd.f32 %v2692, %v2803
      %v2805 = vpop.f32.mrb[0].mxu0
      %2806 = vmatprep.mubr.bf16.mxu0 0
      %2807 = vmatmul.mubr.bf16.gmra.mrb[0].mxu0 %v2627
      %v2808 = vpop.f32.mrb[0].mxu0
      %v2809 = vadd.f32 %v2692, %v2808
      %v2810 = vpop.f32.mrb[0].mxu0
      %v2811 = vpop.f32.mrb[0].mxu0
      %v2812 = vadd.f32 %v2692, %v2811
      %v2813 = vpop.f32.mrb[0].mxu0
      %2814 = vmatprep.mubr.bf16.mxu0 0
      %2815 = vmatmul.mubr.bf16.gmra.mrb[0].mxu0 %v2628
      %v2816 = vpop.f32.mrb[0].mxu0
      %v2817 = vadd.f32 %v2692, %v2816
      %v2818 = vpop.f32.mrb[0].mxu0
      %v2819 = vpop.f32.mrb[0].mxu0
      %v2820 = vadd.f32 %v2692, %v2819
      %v2821 = vpop.f32.mrb[0].mxu0
      %2822 = vmatprep.mubr.bf16.mxu0 0
      %2823 = vmatmul.mubr.bf16.gmra.mrb[0].mxu0 %v2629
      %v2824 = vpop.f32.mrb[0].mxu0
      %v2825 = vadd.f32 %v2692, %v2824
      %v2826 = vpop.f32.mrb[0].mxu0
      %v2827 = vpop.f32.mrb[0].mxu0
      %v2828 = vadd.f32 %v2692, %v2827
      %v2829 = vpop.f32.mrb[0].mxu0
      %2830 = vmatprep.mubr.bf16.mxu0 0
      %2831 = vmatmul.mubr.bf16.gmra.mrb[0].mxu0 %v2630
      %v2832 = vpop.f32.mrb[0].mxu0
      %v2833 = vadd.f32 %v2692, %v2832
      %v2834 = vpop.f32.mrb[0].mxu0
      %v2835 = vpop.f32.mrb[0].mxu0
      %v2836 = vadd.f32 %v2692, %v2835
      %v2837 = vpop.f32.mrb[0].mxu0
      %2838 = vmatprep.mubr.bf16.mxu0 0
      %2839 = vmatmul.mubr.bf16.gmra.mrb[0].mxu0 %v2631
      %v2840 = vpop.f32.mrb[0].mxu0
      %v2841 = vadd.f32 %v2692, %v2840
      %v2842 = vpop.f32.mrb[0].mxu0
      %v2843 = vpop.f32.mrb[0].mxu0
      %v2844 = vadd.f32 %v2692, %v2843
      %v2845 = vpop.f32.mrb[0].mxu0
      %2846 = vmatprep.mubr.bf16.mxu0 0
      %2847 = vmatmul.mubr.bf16.gmra.mrb[0].mxu0 %v2632
      %v2848 = vpop.f32.mrb[0].mxu0
      %v2849 = vadd.f32 %v2692, %v2848
      %v2850 = vpop.f32.mrb[0].mxu0
      %v2851 = vpop.f32.mrb[0].mxu0
      %v2852 = vadd.f32 %v2692, %v2851
      %v2853 = vpop.f32.mrb[0].mxu0
      %2854 = vmatprep.mubr.bf16.mxu0 0
      %2855 = vmatmul.mubr.bf16.gmra.mrb[0].mxu0 %v2633
      %v2856 = vpop.f32.mrb[0].mxu0
      %v2857 = vadd.f32 %v2692, %v2856
      %v2858 = vpop.f32.mrb[0].mxu0
      %v2859 = vpop.f32.mrb[0].mxu0
      %v2860 = vadd.f32 %v2692, %v2859
      %v2861 = vpop.f32.mrb[0].mxu0
      %2862 = vmatprep.mubr.bf16.mxu0 0
      %2863 = vmatmul.mubr.bf16.gmra.mrb[0].mxu0 %v2634
      %v2864 = vpop.f32.mrb[0].mxu0
      %v2865 = vadd.f32 %v2692, %v2864
      %v2866 = vpop.f32.mrb[0].mxu0
      %v2867 = vpop.f32.mrb[0].mxu0
      %v2868 = vadd.f32 %v2692, %v2867
      %v2869 = vpop.f32.mrb[0].mxu0
      %2870 = vmatprep.mubr.bf16.mxu0 0
      %2871 = vmatmul.mubr.bf16.gmra.mrb[0].mxu0 %v2635
      %v2872 = vpop.f32.mrb[0].mxu0
      %v2873 = vadd.f32 %v2692, %v2872
      %v2874 = vpop.f32.mrb[0].mxu0
      %v2875 = vpop.f32.mrb[0].mxu0
      %v2876 = vadd.f32 %v2692, %v2875
      %v2877 = vpop.f32.mrb[0].mxu0
      %2878 = vmatprep.mubr.bf16.mxu0 0
      %2879 = vmatmul.mubr.bf16.gmra.mrb[0].mxu0 %v2636
      %v2880 = vpop.f32.mrb[0].mxu0
      %v2881 = vadd.f32 %v2692, %v2880
      %v2882 = vpop.f32.mrb[0].mxu0
      %v2883 = vpop.f32.mrb[0].mxu0
      %v2884 = vadd.f32 %v2692, %v2883
      %v2885 = vpop.f32.mrb[0].mxu0
      %2886 = vmatprep.mubr.bf16.mxu0 0
      %2887 = vmatmul.mubr.bf16.gmra.mrb[0].mxu0 %v2637
      %v2888 = vpop.f32.mrb[0].mxu0
      %v2889 = vadd.f32 %v2692, %v2888
      %v2890 = vpop.f32.mrb[0].mxu0
      %v2891 = vpop.f32.mrb[0].mxu0
      %v2892 = vadd.f32 %v2692, %v2891
      %v2893 = vpop.f32.mrb[0].mxu0
      %2894 = vmatprep.mubr.bf16.mxu0 0
      %2895 = vmatmul.mubr.bf16.gmra.mrb[0].mxu0 %v2638
      %v2896 = vpop.f32.mrb[0].mxu0
      %v2897 = vadd.f32 %v2692, %v2896
      %v2898 = vpop.f32.mrb[0].mxu0
      %v2899 = vpop.f32.mrb[0].mxu0
      %v2900 = vadd.f32 %v2692, %v2899
      %v2901 = vpop.f32.mrb[0].mxu0
      %2902 = vdwg.mxu0
      %v2903 = vadd.f32 %v2777, %v2655
      %v2904 = vadd.f32 %v2780, %v2656
      %v2905 = vadd.f32 %v2785, %v2657
      %v2906 = vadd.f32 %v2788, %v2658
      %v2907 = vadd.f32 %v2793, %v2659
      %v2908 = vadd.f32 %v2796, %v2660
      %v2909 = vadd.f32 %v2801, %v2661
      %v2910 = vadd.f32 %v2804, %v2662
      %v2911 = vadd.f32 %v2809, %v2663
      %v2912 = vadd.f32 %v2812, %v2664
      %v2913 = vadd.f32 %v2817, %v2665
      %v2914 = vadd.f32 %v2820, %v2666
      %v2915 = vadd.f32 %v2825, %v2667
      %v2916 = vadd.f32 %v2828, %v2668
      %v2917 = vadd.f32 %v2833, %v2669
      %v2918 = vadd.f32 %v2836, %v2670
      %v2919 = vadd.f32 %v2841, %v2671
      %v2920 = vadd.f32 %v2844, %v2672
      %v2921 = vadd.f32 %v2849, %v2673
      %v2922 = vadd.f32 %v2852, %v2674
      %v2923 = vadd.f32 %v2857, %v2675
      %v2924 = vadd.f32 %v2860, %v2676
      %v2925 = vadd.f32 %v2865, %v2677
      %v2926 = vadd.f32 %v2868, %v2678
      %v2927 = vadd.f32 %v2873, %v2679
      %v2928 = vadd.f32 %v2876, %v2680
      %v2929 = vadd.f32 %v2881, %v2681
      %v2930 = vadd.f32 %v2884, %v2682
      %v2931 = vadd.f32 %v2889, %v2683
      %v2932 = vadd.f32 %v2892, %v2684
      %v2933 = vadd.f32 %v2897, %v2685
      %v2934 = vadd.f32 %v2900, %v2686
      %v2935 = vmax.f32 %v2903, 0.0
      %v2936 = vmax.f32 %v2904, 0.0
      %v2937 = vmax.f32 %v2905, 0.0
      %v2938 = vmax.f32 %v2906, 0.0
      %v2939 = vmax.f32 %v2907, 0.0
      %v2940 = vmax.f32 %v2908, 0.0
      %v2941 = vmax.f32 %v2909, 0.0
      %v2942 = vmax.f32 %v2910, 0.0
      %v2943 = vmax.f32 %v2911, 0.0
      %v2944 = vmax.f32 %v2912, 0.0
      %v2945 = vmax.f32 %v2913, 0.0
      %v2946 = vmax.f32 %v2914, 0.0
      %v2947 = vmax.f32 %v2915, 0.0
      %v2948 = vmax.f32 %v2916, 0.0
      %v2949 = vmax.f32 %v2917, 0.0
      %v2950 = vmax.f32 %v2918, 0.0
      %v2951 = vmax.f32 %v2919, 0.0
      %v2952 = vmax.f32 %v2920, 0.0
      %v2953 = vmax.f32 %v2921, 0.0
      %v2954 = vmax.f32 %v2922, 0.0
      %v2955 = vmax.f32 %v2923, 0.0
      %v2956 = vmax.f32 %v2924, 0.0
      %v2957 = vmax.f32 %v2925, 0.0
      %v2958 = vmax.f32 %v2926, 0.0
      %v2959 = vmax.f32 %v2927, 0.0
      %v2960 = vmax.f32 %v2928, 0.0
      %v2961 = vmax.f32 %v2929, 0.0
      %v2962 = vmax.f32 %v2930, 0.0
      %v2963 = vmax.f32 %v2931, 0.0
      %v2964 = vmax.f32 %v2932, 0.0
      %v2965 = vmax.f32 %v2933, 0.0
      %v2966 = vmax.f32 %v2934, 0.0
      %2967 = vst [vmem:[%s278] sm:$0xff] %v2935
      %2968 = vst [vmem:[%s278 + $0x8] sm:$0xff] %v2936
      %2969 = vst [vmem:[%s278 + $0x10] sm:$0xff] %v2937
      %2970 = vst [vmem:[%s278 + $0x18] sm:$0xff] %v2938
      %2971 = vst [vmem:[%s278 + $0x20] sm:$0xff] %v2939
      %2972 = vst [vmem:[%s278 + $0x28] sm:$0xff] %v2940
      %2973 = vst [vmem:[%s278 + $0x30] sm:$0xff] %v2941
      %2974 = vst [vmem:[%s278 + $0x38] sm:$0xff] %v2942
      %2975 = vst [vmem:[%s278 + $0x40] sm:$0xff] %v2943
      %2976 = vst [vmem:[%s278 + $0x48] sm:$0xff] %v2944
      %2977 = vst [vmem:[%s278 + $0x50] sm:$0xff] %v2945
      %2978 = vst [vmem:[%s278 + $0x58] sm:$0xff] %v2946
      %2979 = vst [vmem:[%s278 + $0x60] sm:$0xff] %v2947
      %2980 = vst [vmem:[%s278 + $0x68] sm:$0xff] %v2948
      %2981 = vst [vmem:[%s278 + $0x70] sm:$0xff] %v2949
      %2982 = vst [vmem:[%s278 + $0x78] sm:$0xff] %v2950
      %2983 = vst [vmem:[%s278 + $0x80] sm:$0xff] %v2951
      %2984 = vst [vmem:[%s278 + $0x88] sm:$0xff] %v2952
      %2985 = vst [vmem:[%s278 + $0x90] sm:$0xff] %v2953
      %2986 = vst [vmem:[%s278 + $0x98] sm:$0xff] %v2954
      %2987 = vst [vmem:[%s278 + $0xa0] sm:$0xff] %v2955
      %2988 = vst [vmem:[%s278 + $0xa8] sm:$0xff] %v2956
      %2989 = vst [vmem:[%s278 + $0xb0] sm:$0xff] %v2957
      %2990 = vst [vmem:[%s278 + $0xb8] sm:$0xff] %v2958
      %2991 = vst [vmem:[%s278 + $0xc0] sm:$0xff] %v2959
      %2992 = vst [vmem:[%s278 + $0xc8] sm:$0xff] %v2960
      %2993 = vst [vmem:[%s278 + $0xd0] sm:$0xff] %v2961
      %2994 = vst [vmem:[%s278 + $0xd8] sm:$0xff] %v2962
      %2995 = vst [vmem:[%s278 + $0xe0] sm:$0xff] %v2963
      %2996 = vst [vmem:[%s278 + $0xe8] sm:$0xff] %v2964
      %2997 = vst [vmem:[%s278 + $0xf0] sm:$0xff] %v2965
      %2998 = vst [vmem:[%s278 + $0xf8] sm:$0xff] %v2966
      %p2999 = scmp.lt.s32.totalorder %s18, 1
      %s3000 = scalar_select %p2999, %s18, 1
      %s3001 = smul.addr %s3000, 32
      %s3002 = smul.addr %s3001, 8
      %s3003 = scalar_lea.vmem %s7, %s3002
      // Predicated region
      $region49: #{bottleneck_forward.1} parent=47 // pred_check
        %p3004 = pneg %p188
      $region50: #{bottleneck_forward.1} parent=47 // pred_check_branch
        %3006 = sbr.rel (%p3004) target = $region52
      $region51: #{bottleneck_forward.1} parent=47 // pred_region
        _
      $region52: #{bottleneck_forward.1} parent=47 // pred_fallthru
        _
    $region48: #{bottleneck_forward.1} parent=5 // pred_fallthru
      _
    %p3007 = scmp.le.s32.totalorder 2, %s13
    // Predicated region
    $region53: #{bottleneck_forward.1} parent=5 // pred_check
      %p3008 = pneg %p3007
    $region54: #{bottleneck_forward.1} parent=5 // pred_check_branch
      %3010 = sbr.rel (%p3008) target = $region56
    $region55: #{bottleneck_forward.1} parent=5 // pred_region
      %s3011 = ssub.s32 %s13, 2
      // Predicated region
      $region57: #{bottleneck_forward.1} parent=55 // pred_check
        %p3012 = pneg %p194
      $region58: #{bottleneck_forward.1} parent=55 // pred_check_branch
        %3014 = sbr.rel (%p3012) target = $region60
      $region59: #{bottleneck_forward.1} parent=55 // pred_region
        %p3015 = scmp.lt.s32.totalorder %s19, 1
        %s3016 = scalar_select %p3015, %s19, 1
        %s3017 = smul.addr %s3016, 32
        %s3018 = smul.addr %s3017, 8
        %s3019 = scalar_lea.vmem %s7, %s3018
      $region60: #{bottleneck_forward.1} parent=55 // pred_fallthru
        _
    $region56: #{bottleneck_forward.1} parent=5 // pred_fallthru
      _
  $region6: #{bottleneck_forward.1} parent=0 // loop_footer
    %s17 = sadd.s32 1, %s13
  $region7: #{bottleneck_forward.1} parent=0 // loop_footer_branch
    %12 = sbr.rel target = $region3
  $region8: #{bottleneck_forward.1} parent=0 // loop_exit
    _

</llo_original>
